<compile_context>
chip_gen: v5e
topology: v5e:2x2
jax: 0.10.0
libtpu: 0.0.40
codegen_flags: <defaults>
</compile_context>

<pallas_src>
import functools

import jax
import jax.numpy as jnp
from jax.experimental import pallas as pl
from jax.experimental.pallas import tpu as pltpu


def _round_up(x, m):
    return ((x + m - 1) // m) * m


# ---------------------------------------------------------------------------
# Fused Pallas kernel: embedding gather -> conv/ReLU stack -> max over L
# ---------------------------------------------------------------------------
def _word_encoder_kernel(ids_ref, table_ref, *refs,
                         num_layers, k, pad_left, vocab, cins_p,
                         compute_dtype):
    """One tile of clauses, entire forward pass on-chip.

    ids_ref   : (TN, L, 1) int32   token ids
    table_ref : (V, Ep)    compute_dtype  channel-padded embedding table
    refs      : w_0, b_0, ..., w_{n-1}, b_{n-1}, o_ref[, xpad_scratch]
        w_i : (K * Cin_p_i, Cout_p_i) compute_dtype   (taps stacked on rows)
        b_i : (1, Cout_p_i)           float32
        o_ref        : (TN, Cout_p_last)        float32
        xpad_scratch : (TN, L + K - 1, Cp_max)  float32 VMEM   (only if K > 1)
    """
    w_refs = refs[0:2 * num_layers:2]
    b_refs = refs[1:2 * num_layers:2]
    o_ref = refs[2 * num_layers]
    has_halo = (num_layers > 0 and k > 1)
    xpad_ref = refs[2 * num_layers + 1] if has_halo else None

    tn, seq_len = ids_ref.shape[0], ids_ref.shape[1]
    pad_right = k - 1 - pad_left

    # --- fused embedding lookup: one-hot matmul against the table (MXU). ---
    # TODO(synk): for very large vocabularies (table >> VMEM) this should be a
    #             manual DMA row-gather from HBM instead of a one-hot matmul.
    ids = ids_ref[...]                                              # (TN, L, 1)
    iota_v = jax.lax.broadcasted_iota(jnp.int32, (tn, seq_len, vocab), 2)
    onehot = (ids == iota_v).astype(compute_dtype)                  # (TN, L, V)
    x = jax.lax.dot_general(                                        # (TN, L, Ep) f32
        onehot, table_ref[...],
        dimension_numbers=(((2,), (0,)), ((), ())),
        preferred_element_type=jnp.float32)

    # Zero only the K-1 halo rows of the scratch (all lanes); the central rows
    # are fully rewritten by every layer before being read.
    if has_halo:
        cp_max = xpad_ref.shape[2]
        if pad_left > 0:
            xpad_ref[:, 0:pad_left, :] = jnp.zeros(
                (tn, pad_left, cp_max), jnp.float32)
        if pad_right > 0:
            xpad_ref[:, pad_left + seq_len:, :] = jnp.zeros(
                (tn, pad_right, cp_max), jnp.float32)

    # --- Conv1d + ReLU stack; activations never leave VMEM. ---
    for li in range(num_layers):
        cin_p = cins_p[li]
        if k > 1:
            xpad_ref[:, pad_left:pad_left + seq_len, :cin_p] = x
            # Stack the K shifted views along the lane (channel) axis so each
            # layer is one (K*Cin_p)-deep matmul instead of K shallow ones.
            # Cast each slice to bf16 first so the lane-concat moves half the
            # bytes and the MXU input needs no further conversion.
            win = jnp.concatenate(
                [xpad_ref[:, t:t + seq_len, :cin_p].astype(compute_dtype)
                 for t in range(k)], axis=2)
        else:
            win = x.astype(compute_dtype)
        y = jax.lax.dot_general(                                    # (TN, L, Cout_p)
            win, w_refs[li][...],
            dimension_numbers=(((2,), (0,)), ((), ())),
            preferred_element_type=jnp.float32)
        x = jnp.maximum(y + b_refs[li][...], 0.0)                   # f32 epilogue

    # --- max-pool over the full clause length, fused (XLU reduce). ---
    o_ref[...] = jnp.max(x, axis=1)                                 # (TN, Cout_p)


# ---------------------------------------------------------------------------
# WordEncoder
# ---------------------------------------------------------------------------
class WordEncoderPallas:
    """Input: (total_clause_num, clause_len) int32 token ids
       Output: (total_clause_num, word_conv_size) float32
    """

    def __init__(self, word_weight, word_channels, word_kernel_size, dropout,
                 key, param_dtype=jnp.bfloat16):
        # word_weight: (vocab, embed_dim) pretrained embedding
        # word_channels: list of conv output channel sizes, e.g. [48, 32]
        # word_kernel_size: int, conv kernel width
        # dropout: ignored (identity at inference)
        del dropout
        vocab, embed_dim = word_weight.shape
        self.vocab = int(vocab)
        self.kernel_size = int(word_kernel_size)
        self.param_dtype = param_dtype

        # Channel-padded (lane-dense) embedding table, stored in bf16.
        ep = _round_up(int(embed_dim), 128)
        table = jnp.zeros((self.vocab, ep), jnp.float32)
        table = table.at[:, :embed_dim].set(word_weight.astype(jnp.float32))
        self.table = table.astype(param_dtype)
        self.embed_dim_p = ep

        channels = [int(embed_dim)] + [int(c) for c in word_channels]
        self.cins_p, self.couts_p = [], []
        self.weights, self.biases = [], []
        k = self.kernel_size
        for li in range(len(word_channels)):
            key, kw, kb = jax.random.split(key, 3)
            cin, cout = channels[li], channels[li + 1]
            cin_p, cout_p = _round_up(cin, 128), _round_up(cout, 128)
            w = 0.1 * jax.random.normal(kw, (k, cin, cout), jnp.float32)
            b = 0.1 * jax.random.normal(kb, (cout,), jnp.float32)
            # Zero-pad channels to 128 lanes and stack the K taps along the
            # contraction axis: (K, Cin_p, Cout_p) -> (K*Cin_p, Cout_p).
            w_p = jnp.zeros((k, cin_p, cout_p), jnp.float32)
            w_p = w_p.at[:, :cin, :cout].set(w)
            w_p = w_p.reshape(k * cin_p, cout_p).astype(param_dtype)
            b_p = jnp.zeros((1, cout_p), jnp.float32).at[:, :cout].set(b[None])
            self.weights.append(w_p)
            self.biases.append(b_p)
            self.cins_p.append(cin_p)
            self.couts_p.append(cout_p)

        self.out_channels = channels[-1]
        self.out_channels_p = self.couts_p[-1] if word_channels else ep

    @staticmethod
    def _pick_tile_n(n, seq_len, cp_max, k):
        # Keep the largest per-tile intermediate (the stacked conv window,
        # TN x L x K*Cp) around ~2 MiB so double-buffered blocks stay far
        # below v7x's 64 MiB physical VMEM (and default scoped limits).
        budget = 2 * 1024 * 1024
        per_clause = seq_len * cp_max * max(k, 1) * 4
        tn = max(8, budget // max(per_clause, 1))
        if tn >= n:
            return int(n)
        return int(max(8, (tn // 8) * 8))   # sublane-aligned partial tiles

    def __call__(self, inputs):
        n, seq_len = inputs.shape
        k = self.kernel_size
        pad_left = (k - 1) // 2
        num_layers = len(self.weights)
        cp_max = max(self.cins_p) if num_layers else self.embed_dim_p
        cout_p = self.out_channels_p

        tn = self._pick_tile_n(n, seq_len, cp_max, k)
        grid = (pl.cdiv(n, tn),)

        kern = functools.partial(
            _word_encoder_kernel,
            num_layers=num_layers, k=k, pad_left=pad_left, vocab=self.vocab,
            cins_p=tuple(self.cins_p), compute_dtype=self.param_dtype)

        # ids as (N, L, 1) so the lane dim is trivial and no in-kernel reshape
        # of the int32 block is needed.
        ids3 = inputs.astype(jnp.int32)[:, :, None]

        in_specs = [
            pl.BlockSpec((tn, seq_len, 1), lambda i: (i, 0, 0)),      # ids
            pl.BlockSpec(self.table.shape, lambda i: (0, 0)),         # table
        ]
        args = [ids3, self.table]
        for w, b in zip(self.weights, self.biases):
            in_specs.append(pl.BlockSpec(w.shape, lambda i: (0, 0)))  # weights
            in_specs.append(pl.BlockSpec(b.shape, lambda i: (0, 0)))  # bias
            args.extend([w, b])

        scratch_shapes = []
        if num_layers > 0 and k > 1:
            scratch_shapes.append(
                pltpu.VMEM((tn, seq_len + k - 1, cp_max), jnp.float32))

        # Advisory cost estimate for XLA's scheduler around the custom call.
        flops = 2 * n * seq_len * self.vocab * self.embed_dim_p
        for cin_p, co_p in zip(self.cins_p, self.couts_p):
            flops += 2 * n * seq_len * k * cin_p * co_p
        bytes_accessed = (ids3.size * 4
                          + self.table.size * self.table.dtype.itemsize
                          + sum(w.size * w.dtype.itemsize
                                + b.size * b.dtype.itemsize
                                for w, b in zip(self.weights, self.biases))
                          + n * cout_p * 4)
        cost = pl.CostEstimate(flops=int(flops), transcendentals=0,
                               bytes_accessed=int(bytes_accessed))

        out_full = pl.pallas_call(
            kern,
            out_shape=jax.ShapeDtypeStruct((n, cout_p), jnp.float32),
            grid=grid,
            in_specs=in_specs,
            out_specs=pl.BlockSpec((tn, cout_p), lambda i: (i, 0)),
            scratch_shapes=scratch_shapes,
            compiler_params=pltpu.CompilerParams(
                dimension_semantics=("parallel",),
                vmem_limit_bytes=32 * 1024 * 1024),
            cost_estimate=cost,
        )(*args)

        # Drop the lane padding (store inside the kernel stays lane-dense).
        return out_full[:, :self.out_channels]


# ---------------------------------------------------------------------------
# Pure-JAX reference (uses the same bf16-rounded parameters)
# ---------------------------------------------------------------------------
def reference_forward(encoder, inputs):
    k = encoder.kernel_size
    pad_left = (k - 1) // 2
    pad_right = k - 1 - pad_left
    x = jnp.take(encoder.table.astype(jnp.float32), inputs, axis=0)  # (N, L, Ep)
    seq_len = x.shape[1]
    for w, b, cin_p in zip(encoder.weights, encoder.biases, encoder.cins_p):
        w3 = w.astype(jnp.float32).reshape(k, cin_p, -1)
        xp = jnp.pad(x, ((0, 0), (pad_left, pad_right), (0, 0)))
        y = sum(jnp.einsum("nlc,cd->nld", xp[:, t:t + seq_len, :], w3[t],
                           precision=jax.lax.Precision.HIGHEST)
                for t in range(k))
        x = jnp.maximum(y + b.astype(jnp.float32), 0.0)
    out = jnp.max(x, axis=1)
    return out[:, :encoder.out_channels]


# ---------------------------------------------------------------------------
# Demo
# ---------------------------------------------------------------------------
if __name__ == "__main__":
    key = jax.random.PRNGKey(0)
    k_emb, k_tok, k_params = jax.random.split(key, 3)

    vocab, embed_dim = 50, 32
    total_clause_num, clause_len = 8, 16
    word_channels = [48, 32]          # final word_conv_size = 32
    word_kernel_size = 3
    dropout = 0.1                     # identity at inference

    word_weight = jax.random.normal(k_emb, (vocab, embed_dim), jnp.float32)
    inputs = jax.random.randint(
        k_tok, (total_clause_num, clause_len), 0, vocab, dtype=jnp.int32)

    encoder = WordEncoderPallas(
        word_weight, word_channels, word_kernel_size, dropout, k_params)

    out = encoder(inputs)
    out = jax.block_until_ready(out)

    assert out.shape == (total_clause_num, word_channels[-1]), out.shape
    assert out.dtype == jnp.float32

    ref = reference_forward(encoder, inputs)
    assert jnp.allclose(out, ref, rtol=1e-1, atol=1e-1), (
        float(jnp.max(jnp.abs(out - ref))))

    print("KERNEL_OK")
</pallas_src>

<mosaic_0001>
module attributes {stable_mosaic.version = 11 : i64} {
  func.func @_word_encoder_kernel(%arg0: i32, %arg1: memref<8x16x1xi32, #tpu.memory_space<vmem>>, %arg2: memref<50x128xbf16, #tpu.memory_space<vmem>>, %arg3: memref<384x128xbf16, #tpu.memory_space<vmem>>, %arg4: memref<1x128xf32, #tpu.memory_space<vmem>>, %arg5: memref<384x128xbf16, #tpu.memory_space<vmem>>, %arg6: memref<1x128xf32, #tpu.memory_space<vmem>>, %arg7: memref<8x128xf32, #tpu.memory_space<vmem>>, %arg8: memref<8x18x128xf32, #tpu.memory_space<vmem>>) attributes {dimension_semantics = [#tpu.dimension_semantics<parallel>], iteration_bounds = array<i64: 1>, scalar_prefetch = 0 : i64, scratch_operands = 1 : i64, tpu.core_type = #tpu.core_type<tc>, window_params = [{transform_indices = @transform_0, window_bounds = array<i64: 8, 16, 1>}, {pipeline_mode = #tpu.pipeline_mode<synchronous>, transform_indices = @transform_1, window_bounds = array<i64: 50, 128>}, {pipeline_mode = #tpu.pipeline_mode<synchronous>, transform_indices = @transform_2, window_bounds = array<i64: 384, 128>}, {pipeline_mode = #tpu.pipeline_mode<synchronous>, transform_indices = @transform_3, window_bounds = array<i64: 1, 128>}, {pipeline_mode = #tpu.pipeline_mode<synchronous>, transform_indices = @transform_4, window_bounds = array<i64: 384, 128>}, {pipeline_mode = #tpu.pipeline_mode<synchronous>, transform_indices = @transform_5, window_bounds = array<i64: 1, 128>}, {transform_indices = @transform_6, window_bounds = array<i64: 8, 128>}]} {
    %c0 = arith.constant 0 : index
    %c0_0 = arith.constant 0 : index
    %c0_1 = arith.constant 0 : index
    %0 = vector.load %arg1[%c0, %c0_0, %c0_1] : memref<8x16x1xi32, #tpu.memory_space<vmem>>, vector<8x16x1xi32>
    %1 = tpu.iota {dimensions = array<i32: 2>} : vector<8x16x50xi32>
    %2 = vector.broadcast %0 : vector<8x16x1xi32> to vector<8x16x50xi32>
    %3 = arith.cmpi eq, %2, %1 : vector<8x16x50xi32>
    %4 = arith.extui %3 : vector<8x16x50xi1> to vector<8x16x50xi32>
    %5 = arith.sitofp %4 : vector<8x16x50xi32> to vector<8x16x50xf32>
    %6 = arith.truncf %5 : vector<8x16x50xf32> to vector<8x16x50xbf16>
    %c0_2 = arith.constant 0 : index
    %c0_3 = arith.constant 0 : index
    %7 = vector.load %arg2[%c0_2, %c0_3] : memref<50x128xbf16, #tpu.memory_space<vmem>>, vector<50x128xbf16>
    %cst = arith.constant dense<0.000000e+00> : vector<8x16x128xf32>
    %8 = tpu.matmul %6, %7, %cst {dimension_numbers = #tpu.dot_dimension_numbers<[2], [0], [0, 1], [1], [0, 0, 0, 1, 1, 1], [], []>} : vector<8x16x50xbf16>, vector<50x128xbf16>, vector<8x16x128xf32> -> vector<8x16x128xf32>
    %cst_4 = arith.constant 0.000000e+00 : f32
    %9 = vector.broadcast %cst_4 : f32 to vector<8x1x128xf32>
    %c0_5 = arith.constant 0 : index
    %c0_6 = arith.constant 0 : index
    %c0_7 = arith.constant 0 : index
    %10 = vector.load %arg8[%c0_5, %c0_6, %c0_7] : memref<8x18x128xf32, #tpu.memory_space<vmem>>, vector<8x1x128xf32>
    tpu.vector_store %arg8[%c0_5, %c0_6, %c0_7], %9 {strides = array<i32>} : memref<8x18x128xf32, #tpu.memory_space<vmem>>, vector<8x1x128xf32>,
    %cst_8 = arith.constant 0.000000e+00 : f32
    %11 = vector.broadcast %cst_8 : f32 to vector<8x1x128xf32>
    %c0_9 = arith.constant 0 : index
    %c17 = arith.constant 17 : index
    %c0_10 = arith.constant 0 : index
    %12 = vector.load %arg8[%c0_9, %c17, %c0_10] : memref<8x18x128xf32, #tpu.memory_space<vmem>>, vector<8x1x128xf32>
    tpu.vector_store %arg8[%c0_9, %c17, %c0_10], %11 {strides = array<i32>} : memref<8x18x128xf32, #tpu.memory_space<vmem>>, vector<8x1x128xf32>,
    %c0_11 = arith.constant 0 : index
    %c1 = arith.constant 1 : index
    %c0_12 = arith.constant 0 : index
    %13 = vector.load %arg8[%c0_11, %c1, %c0_12] : memref<8x18x128xf32, #tpu.memory_space<vmem>>, vector<8x16x128xf32>
    tpu.vector_store %arg8[%c0_11, %c1, %c0_12], %8 {strides = array<i32>} : memref<8x18x128xf32, #tpu.memory_space<vmem>>, vector<8x16x128xf32>,
    %c0_13 = arith.constant 0 : index
    %c0_14 = arith.constant 0 : index
    %c0_15 = arith.constant 0 : index
    %14 = vector.load %arg8[%c0_13, %c0_14, %c0_15] : memref<8x18x128xf32, #tpu.memory_space<vmem>>, vector<8x16x128xf32>
    %15 = arith.truncf %14 : vector<8x16x128xf32> to vector<8x16x128xbf16>
    %c0_16 = arith.constant 0 : index
    %c1_17 = arith.constant 1 : index
    %c0_18 = arith.constant 0 : index
    %16 = vector.load %arg8[%c0_16, %c1_17, %c0_18] : memref<8x18x128xf32, #tpu.memory_space<vmem>>, vector<8x16x128xf32>
    %17 = arith.truncf %16 : vector<8x16x128xf32> to vector<8x16x128xbf16>
    %c0_19 = arith.constant 0 : index
    %c2 = arith.constant 2 : index
    %c0_20 = arith.constant 0 : index
    %18 = vector.load %arg8[%c0_19, %c2, %c0_20] : memref<8x18x128xf32, #tpu.memory_space<vmem>>, vector<8x16x128xf32>
    %19 = arith.truncf %18 : vector<8x16x128xf32> to vector<8x16x128xbf16>
    %20 = tpu.concatenate %15, %17, %19 in 2 : vector<8x16x128xbf16>, vector<8x16x128xbf16>, vector<8x16x128xbf16> -> vector<8x16x384xbf16>
    %c0_21 = arith.constant 0 : index
    %c0_22 = arith.constant 0 : index
    %21 = vector.load %arg3[%c0_21, %c0_22] : memref<384x128xbf16, #tpu.memory_space<vmem>>, vector<384x128xbf16>
    %cst_23 = arith.constant dense<0.000000e+00> : vector<8x16x128xf32>
    %22 = tpu.matmul %20, %21, %cst_23 {dimension_numbers = #tpu.dot_dimension_numbers<[2], [0], [0, 1], [1], [0, 0, 0, 1, 1, 1], [], []>} : vector<8x16x384xbf16>, vector<384x128xbf16>, vector<8x16x128xf32> -> vector<8x16x128xf32>
    %c0_24 = arith.constant 0 : index
    %c0_25 = arith.constant 0 : index
    %23 = vector.load %arg4[%c0_24, %c0_25] : memref<1x128xf32, #tpu.memory_space<vmem>>, vector<1x128xf32>
    %24 = vector.shape_cast %23 : vector<1x128xf32> to vector<1x1x128xf32>
    %25 = vector.broadcast %24 : vector<1x1x128xf32> to vector<8x16x128xf32>
    %26 = arith.addf %22, %25 : vector<8x16x128xf32>
    %cst_26 = arith.constant 0.000000e+00 : f32
    %27 = vector.broadcast %cst_26 : f32 to vector<8x16x128xf32>
    %28 = arith.maximumf %26, %27 : vector<8x16x128xf32>
    %c0_27 = arith.constant 0 : index
    %c1_28 = arith.constant 1 : index
    %c0_29 = arith.constant 0 : index
    %29 = vector.load %arg8[%c0_27, %c1_28, %c0_29] : memref<8x18x128xf32, #tpu.memory_space<vmem>>, vector<8x16x128xf32>
    tpu.vector_store %arg8[%c0_27, %c1_28, %c0_29], %28 {strides = array<i32>} : memref<8x18x128xf32, #tpu.memory_space<vmem>>, vector<8x16x128xf32>,
    %c0_30 = arith.constant 0 : index
    %c0_31 = arith.constant 0 : index
    %c0_32 = arith.constant 0 : index
    %30 = vector.load %arg8[%c0_30, %c0_31, %c0_32] : memref<8x18x128xf32, #tpu.memory_space<vmem>>, vector<8x16x128xf32>
    %31 = arith.truncf %30 : vector<8x16x128xf32> to vector<8x16x128xbf16>
    %c0_33 = arith.constant 0 : index
    %c1_34 = arith.constant 1 : index
    %c0_35 = arith.constant 0 : index
    %32 = vector.load %arg8[%c0_33, %c1_34, %c0_35] : memref<8x18x128xf32, #tpu.memory_space<vmem>>, vector<8x16x128xf32>
    %33 = arith.truncf %32 : vector<8x16x128xf32> to vector<8x16x128xbf16>
    %c0_36 = arith.constant 0 : index
    %c2_37 = arith.constant 2 : index
    %c0_38 = arith.constant 0 : index
    %34 = vector.load %arg8[%c0_36, %c2_37, %c0_38] : memref<8x18x128xf32, #tpu.memory_space<vmem>>, vector<8x16x128xf32>
    %35 = arith.truncf %34 : vector<8x16x128xf32> to vector<8x16x128xbf16>
    %36 = tpu.concatenate %31, %33, %35 in 2 : vector<8x16x128xbf16>, vector<8x16x128xbf16>, vector<8x16x128xbf16> -> vector<8x16x384xbf16>
    %c0_39 = arith.constant 0 : index
    %c0_40 = arith.constant 0 : index
    %37 = vector.load %arg5[%c0_39, %c0_40] : memref<384x128xbf16, #tpu.memory_space<vmem>>, vector<384x128xbf16>
    %cst_41 = arith.constant dense<0.000000e+00> : vector<8x16x128xf32>
    %38 = tpu.matmul %36, %37, %cst_41 {dimension_numbers = #tpu.dot_dimension_numbers<[2], [0], [0, 1], [1], [0, 0, 0, 1, 1, 1], [], []>} : vector<8x16x384xbf16>, vector<384x128xbf16>, vector<8x16x128xf32> -> vector<8x16x128xf32>
    %c0_42 = arith.constant 0 : index
    %c0_43 = arith.constant 0 : index
    %39 = vector.load %arg6[%c0_42, %c0_43] : memref<1x128xf32, #tpu.memory_space<vmem>>, vector<1x128xf32>
    %40 = vector.shape_cast %39 : vector<1x128xf32> to vector<1x1x128xf32>
    %41 = vector.broadcast %40 : vector<1x1x128xf32> to vector<8x16x128xf32>
    %42 = arith.addf %38, %41 : vector<8x16x128xf32>
    %cst_44 = arith.constant 0.000000e+00 : f32
    %43 = vector.broadcast %cst_44 : f32 to vector<8x16x128xf32>
    %44 = arith.maximumf %42, %43 : vector<8x16x128xf32>
    %cst_45 = arith.constant dense<0xFF800000> : vector<8x128xf32>
    %45 = vector.multi_reduction <maximumf>, %44, %cst_45 [1] : vector<8x16x128xf32> to vector<8x128xf32>
    %c0_46 = arith.constant 0 : index
    %c0_47 = arith.constant 0 : index
    %46 = vector.load %arg7[%c0_46, %c0_47] : memref<8x128xf32, #tpu.memory_space<vmem>>, vector<8x128xf32>
    tpu.vector_store %arg7[%c0_46, %c0_47], %45 {strides = array<i32>} : memref<8x128xf32, #tpu.memory_space<vmem>>, vector<8x128xf32>,
    return
  }
  func.func @transform_0(%arg0: i32) -> (i32, i32, i32) {
    %c0_i32 = arith.constant 0 : i32
    %c0_i32_0 = arith.constant 0 : i32
    %c0_i32_1 = arith.constant 0 : i32
    return %arg0, %c0_i32, %c0_i32_0 : i32, i32, i32
  }
  func.func @transform_1(%arg0: i32) -> (i32, i32) {
    %c0_i32 = arith.constant 0 : i32
    %c0_i32_0 = arith.constant 0 : i32
    %c0_i32_1 = arith.constant 0 : i32
    return %c0_i32, %c0_i32_0 : i32, i32
  }
  func.func @transform_2(%arg0: i32) -> (i32, i32) {
    %c0_i32 = arith.constant 0 : i32
    %c0_i32_0 = arith.constant 0 : i32
    %c0_i32_1 = arith.constant 0 : i32
    return %c0_i32, %c0_i32_0 : i32, i32
  }
  func.func @transform_3(%arg0: i32) -> (i32, i32) {
    %c0_i32 = arith.constant 0 : i32
    %c0_i32_0 = arith.constant 0 : i32
    %c0_i32_1 = arith.constant 0 : i32
    return %c0_i32, %c0_i32_0 : i32, i32
  }
  func.func @transform_4(%arg0: i32) -> (i32, i32) {
    %c0_i32 = arith.constant 0 : i32
    %c0_i32_0 = arith.constant 0 : i32
    %c0_i32_1 = arith.constant 0 : i32
    return %c0_i32, %c0_i32_0 : i32, i32
  }
  func.func @transform_5(%arg0: i32) -> (i32, i32) {
    %c0_i32 = arith.constant 0 : i32
    %c0_i32_0 = arith.constant 0 : i32
    %c0_i32_1 = arith.constant 0 : i32
    return %c0_i32, %c0_i32_0 : i32, i32
  }
  func.func @transform_6(%arg0: i32) -> (i32, i32) {
    %c0_i32 = arith.constant 0 : i32
    %c0_i32_0 = arith.constant 0 : i32
    return %arg0, %c0_i32 : i32, i32
  }
}

</mosaic_0001>

<llo_original>
// kernel: tpu_custom_call.1
$region0: #{tpu_custom_call.1}
  #allocation0 [shape = 'u32[]', space=smem, size = 0x4, offset = 0x4, fixed_abs, tag = 'smem constant byte address 0x4 - core index']
  #allocation1 [shape = 'u32[72,128]{1,0:T(1,128)}', space=vmem, size = 0x9000, scoped, tag = 'internal scratch']
  #allocation2 [shape = 'f32[8,18,128]{2,1,0:T(8,128)}', space=vmem, size = 0x18000, scoped, tag = 'scratch operand']
  %s0 = inlined_call_operand.vmem [shape: s32[8,16,1], index: 0, kind: input, shape index: {}]
  %s1 = inlined_call_operand.vmem [shape: bf16[50,128], index: 1, kind: input, shape index: {}]
  %s2 = inlined_call_operand.hbm [shape: bf16[384,128], index: 2, kind: input, shape index: {}]
  %s3 = inlined_call_operand.vmem [shape: f32[1,128], index: 3, kind: input, shape index: {}]
  %s4 = inlined_call_operand.hbm [shape: bf16[384,128], index: 4, kind: input, shape index: {}]
  %s5 = inlined_call_operand.vmem [shape: f32[1,128], index: 5, kind: input, shape index: {}]
  %s6 = inlined_call_operand.hbm [shape: f32[8,128], index: 6, kind: output, shape index: {}]
  %s7 = sld [smem:[#allocation0]]
  $region42: #{tpu_custom_call.1} parent=0
    _
  %s9 = ssub.s32 1, %s7
  %s10 = scalar_select 0, %s9, %s7
  $region1: #{tpu_custom_call.1} parent=0
    #allocation3 [shape = 'u8[98304]{0}', space=vmem, size = 0x18000, scoped, tag = 'input window, operand 2, single buffered']
    #allocation4 [shape = 's32[1]{0}', space=sflag, size = 0x4, scoped, tag = 'scoped memory for tpu_custom_call.1']
    #allocation5 [shape = 's32[1]{0}', space=sflag, size = 0x4, scoped, tag = 'scoped memory for tpu_custom_call.1']
    #allocation6 [shape = 'u8[98304]{0}', space=vmem, size = 0x18000, scoped, tag = 'input window, operand 4, single buffered']
    #allocation7 [shape = 's32[1]{0}', space=sflag, size = 0x4, scoped, tag = 'scoped memory for tpu_custom_call.1']
    #allocation8 [shape = 'u8[4096]{0}', space=vmem, size = 0x1000, scoped, tag = 'output window, operand 0, single buffered']
    %11 = vsyncpa [#allocation4], 0
    %12 = vsyncpa [#allocation7], 0
    %13 = vsyncpa [#allocation5], 0
    // Predicated region
    $region2: #{tpu_custom_call.1} parent=1 // pred_check
      _
    $region3: #{tpu_custom_call.1} parent=1 // pred_check_branch
      %15 = sbr.rel (0) target = $region5
    $region4: #{tpu_custom_call.1} parent=1 // pred_region
      _
    $region5: #{tpu_custom_call.1} parent=1 // pred_fallthru
      _
    // Predicated region
    $region6: #{tpu_custom_call.1} parent=1 // pred_check
      _
    $region7: #{tpu_custom_call.1} parent=1 // pred_check_branch
      %17 = sbr.rel (0) target = $region9
    $region8: #{tpu_custom_call.1} parent=1 // pred_region
      _
    $region9: #{tpu_custom_call.1} parent=1 // pred_fallthru
      _
    // Predicated region
    $region10: #{tpu_custom_call.1} parent=1 // pred_check
      _
    $region11: #{tpu_custom_call.1} parent=1 // pred_check_branch
      %19 = sbr.rel (0) target = $region13
    $region12: #{tpu_custom_call.1} parent=1 // pred_region
      %21 = vsyncadd [#allocation4], 0
      %s22 = sshll.u32 %s2, 4
      %s23 = int_to_ptr.hbm [resolvable:$true] %s22
      %s24 = sshll.u32 [#allocation3], 4
      %s25 = int_to_ptr.vmem [resolvable:$true] %s24
      %30 = dma.hbm_to_vmem [thread:$0]  %s23, 3072, %s25, [#allocation4], 64, 64, 4
    $region13: #{tpu_custom_call.1} parent=1 // pred_fallthru
      _
    // Predicated region
    $region14: #{tpu_custom_call.1} parent=1 // pred_check
      _
    $region15: #{tpu_custom_call.1} parent=1 // pred_check_branch
      %32 = sbr.rel (0) target = $region17
    $region16: #{tpu_custom_call.1} parent=1 // pred_region
      _
    $region17: #{tpu_custom_call.1} parent=1 // pred_fallthru
      _
    // Predicated region
    $region18: #{tpu_custom_call.1} parent=1 // pred_check
      _
    $region19: #{tpu_custom_call.1} parent=1 // pred_check_branch
      %34 = sbr.rel (0) target = $region21
    $region20: #{tpu_custom_call.1} parent=1 // pred_region
      %36 = vsyncadd [#allocation7], 0
      %s37 = sshll.u32 %s4, 4
      %s38 = int_to_ptr.hbm [resolvable:$true] %s37
      %s39 = sshll.u32 [#allocation6], 4
      %s40 = int_to_ptr.vmem [resolvable:$true] %s39
      %45 = dma.hbm_to_vmem [thread:$0]  %s38, 3072, %s40, [#allocation7], 64, 64, 4
    $region21: #{tpu_custom_call.1} parent=1 // pred_fallthru
      _
    // Predicated region
    $region22: #{tpu_custom_call.1} parent=1 // pred_check
      _
    $region23: #{tpu_custom_call.1} parent=1 // pred_check_branch
      %47 = sbr.rel (0) target = $region25
    $region24: #{tpu_custom_call.1} parent=1 // pred_region
      _
    $region25: #{tpu_custom_call.1} parent=1 // pred_fallthru
      _
    // Predicated region
    $region26: #{tpu_custom_call.1} parent=1 // pred_check
      _
    $region27: #{tpu_custom_call.1} parent=1 // pred_check_branch
      %49 = sbr.rel (0) target = $region29
    $region28: #{tpu_custom_call.1} parent=1 // pred_region
      %51 = dma.done [#allocation4], 3072
    $region29: #{tpu_custom_call.1} parent=1 // pred_fallthru
      _
    // Predicated region
    $region30: #{tpu_custom_call.1} parent=1 // pred_check
      _
    $region31: #{tpu_custom_call.1} parent=1 // pred_check_branch
      %53 = sbr.rel (0) target = $region33
    $region32: #{tpu_custom_call.1} parent=1 // pred_region
      %55 = dma.done [#allocation7], 3072
    $region33: #{tpu_custom_call.1} parent=1 // pred_fallthru
      _
    %v57 = vld [vmem:[%s0] sm:$0xff]
    %v58 = vld [vmem:[%s0 + $0x8] sm:$0xff]
    %v59 = vld [vmem:[%s0 + $0x10] sm:$0xff]
    %v60 = vld [vmem:[%s0 + $0x18] sm:$0xff]
    %v61 = vld [vmem:[%s0 + $0x20] sm:$0xff]
    %v62 = vld [vmem:[%s0 + $0x28] sm:$0xff]
    %v63 = vld [vmem:[%s0 + $0x30] sm:$0xff]
    %v64 = vld [vmem:[%s0 + $0x38] sm:$0xff]
    %v65 = vld [vmem:[%s0 + $0x40] sm:$0xff]
    %v66 = vld [vmem:[%s0 + $0x48] sm:$0xff]
    %v67 = vld [vmem:[%s0 + $0x50] sm:$0xff]
    %v68 = vld [vmem:[%s0 + $0x58] sm:$0xff]
    %v69 = vld [vmem:[%s0 + $0x60] sm:$0xff]
    %v70 = vld [vmem:[%s0 + $0x68] sm:$0xff]
    %v71 = vld [vmem:[%s0 + $0x70] sm:$0xff]
    %v72 = vld [vmem:[%s0 + $0x78] sm:$0xff]
    %v73 = vlaneseq
    %v74 = vand.u32 %v73, 127
    %75 = vset.pattern.permute.xlu0 0
    %76 = vperm.xlu0 %75, %v57
    %v77 = vpop.permute.xlu0 %76
    %78 = vset.pattern.permute.xlu0 0
    %79 = vperm.xlu0 %78, %v58
    %v80 = vpop.permute.xlu0 %79
    %81 = vset.pattern.permute.xlu0 0
    %82 = vperm.xlu0 %81, %v59
    %v83 = vpop.permute.xlu0 %82
    %84 = vset.pattern.permute.xlu0 0
    %85 = vperm.xlu0 %84, %v60
    %v86 = vpop.permute.xlu0 %85
    %87 = vset.pattern.permute.xlu0 0
    %88 = vperm.xlu0 %87, %v61
    %v89 = vpop.permute.xlu0 %88
    %90 = vset.pattern.permute.xlu0 0
    %91 = vperm.xlu0 %90, %v62
    %v92 = vpop.permute.xlu0 %91
    %93 = vset.pattern.permute.xlu0 0
    %94 = vperm.xlu0 %93, %v63
    %v95 = vpop.permute.xlu0 %94
    %96 = vset.pattern.permute.xlu0 0
    %97 = vperm.xlu0 %96, %v64
    %v98 = vpop.permute.xlu0 %97
    %99 = vset.pattern.permute.xlu0 0
    %100 = vperm.xlu0 %99, %v65
    %v101 = vpop.permute.xlu0 %100
    %102 = vset.pattern.permute.xlu0 0
    %103 = vperm.xlu0 %102, %v66
    %v104 = vpop.permute.xlu0 %103
    %105 = vset.pattern.permute.xlu0 0
    %106 = vperm.xlu0 %105, %v67
    %v107 = vpop.permute.xlu0 %106
    %108 = vset.pattern.permute.xlu0 0
    %109 = vperm.xlu0 %108, %v68
    %v110 = vpop.permute.xlu0 %109
    %111 = vset.pattern.permute.xlu0 0
    %112 = vperm.xlu0 %111, %v69
    %v113 = vpop.permute.xlu0 %112
    %114 = vset.pattern.permute.xlu0 0
    %115 = vperm.xlu0 %114, %v70
    %v116 = vpop.permute.xlu0 %115
    %117 = vset.pattern.permute.xlu0 0
    %118 = vperm.xlu0 %117, %v71
    %v119 = vpop.permute.xlu0 %118
    %120 = vset.pattern.permute.xlu0 0
    %121 = vperm.xlu0 %120, %v72
    %v122 = vpop.permute.xlu0 %121
    %vm123 = vcmp.eq.s32.totalorder %v77, %v74
    %vm124 = vcmp.eq.s32.totalorder %v80, %v74
    %vm125 = vcmp.eq.s32.totalorder %v83, %v74
    %vm126 = vcmp.eq.s32.totalorder %v86, %v74
    %vm127 = vcmp.eq.s32.totalorder %v89, %v74
    %vm128 = vcmp.eq.s32.totalorder %v92, %v74
    %vm129 = vcmp.eq.s32.totalorder %v95, %v74
    %vm130 = vcmp.eq.s32.totalorder %v98, %v74
    %vm131 = vcmp.eq.s32.totalorder %v101, %v74
    %vm132 = vcmp.eq.s32.totalorder %v104, %v74
    %vm133 = vcmp.eq.s32.totalorder %v107, %v74
    %vm134 = vcmp.eq.s32.totalorder %v110, %v74
    %vm135 = vcmp.eq.s32.totalorder %v113, %v74
    %vm136 = vcmp.eq.s32.totalorder %v116, %v74
    %vm137 = vcmp.eq.s32.totalorder %v119, %v74
    %vm138 = vcmp.eq.s32.totalorder %v122, %v74
    %v139 = vsel %vm123, 1, 0
    %v140 = vsel %vm124, 1, 0
    %v141 = vsel %vm125, 1, 0
    %v142 = vsel %vm126, 1, 0
    %v143 = vsel %vm127, 1, 0
    %v144 = vsel %vm128, 1, 0
    %v145 = vsel %vm129, 1, 0
    %v146 = vsel %vm130, 1, 0
    %v147 = vsel %vm131, 1, 0
    %v148 = vsel %vm132, 1, 0
    %v149 = vsel %vm133, 1, 0
    %v150 = vsel %vm134, 1, 0
    %v151 = vsel %vm135, 1, 0
    %v152 = vsel %vm136, 1, 0
    %v153 = vsel %vm137, 1, 0
    %v154 = vsel %vm138, 1, 0
    %v155 = vcvt.s32.f32 %v139
    %v156 = vcvt.s32.f32 %v140
    %v157 = vcvt.s32.f32 %v141
    %v158 = vcvt.s32.f32 %v142
    %v159 = vcvt.s32.f32 %v143
    %v160 = vcvt.s32.f32 %v144
    %v161 = vcvt.s32.f32 %v145
    %v162 = vcvt.s32.f32 %v146
    %v163 = vcvt.s32.f32 %v147
    %v164 = vcvt.s32.f32 %v148
    %v165 = vcvt.s32.f32 %v149
    %v166 = vcvt.s32.f32 %v150
    %v167 = vcvt.s32.f32 %v151
    %v168 = vcvt.s32.f32 %v152
    %v169 = vcvt.s32.f32 %v153
    %v170 = vcvt.s32.f32 %v154
    %v171 = vpack.c.bf16 %v155, %v155
    %v172 = vpack.c.bf16 %v156, %v156
    %v173 = vpack.c.bf16 %v157, %v157
    %v174 = vpack.c.bf16 %v158, %v158
    %v175 = vpack.c.bf16 %v159, %v159
    %v176 = vpack.c.bf16 %v160, %v160
    %v177 = vpack.c.bf16 %v161, %v161
    %v178 = vpack.c.bf16 %v162, %v162
    %v179 = vpack.c.bf16 %v163, %v163
    %v180 = vpack.c.bf16 %v164, %v164
    %v181 = vpack.c.bf16 %v165, %v165
    %v182 = vpack.c.bf16 %v166, %v166
    %v183 = vpack.c.bf16 %v167, %v167
    %v184 = vpack.c.bf16 %v168, %v168
    %v185 = vpack.c.bf16 %v169, %v169
    %v186 = vpack.c.bf16 %v170, %v170
    %v187 = vld [vmem:[%s1] sm:$0xf]
    %v188 = vld [vmem:[%s1 + $0x4] sm:$0xf]
    %v189 = vld [vmem:[%s1 + $0x8] sm:$0xf]
    %v190 = vld [vmem:[%s1 + $0xc] sm:$0xf]
    %v191 = vld [vmem:[%s1 + $0x10] sm:$0xf]
    %v192 = vld [vmem:[%s1 + $0x14] sm:$0xf]
    %v193 = vld [vmem:[%s1 + $0x18] sm:$0x1]
    %v210 = vunpack.c.l.b16 %v171
    %v211 = vunpack.c.l.b16 %v172
    %v212 = vunpack.c.l.b16 %v173
    %v213 = vunpack.c.l.b16 %v174
    %v214 = vunpack.c.l.b16 %v175
    %v215 = vunpack.c.l.b16 %v176
    %v216 = vunpack.c.l.b16 %v177
    %v217 = vunpack.c.l.b16 %v178
    %v218 = vunpack.c.l.b16 %v179
    %v219 = vunpack.c.l.b16 %v180
    %v220 = vunpack.c.l.b16 %v181
    %v221 = vunpack.c.l.b16 %v182
    %v222 = vunpack.c.l.b16 %v183
    %v223 = vunpack.c.l.b16 %v184
    %v224 = vunpack.c.l.b16 %v185
    %v225 = vunpack.c.l.b16 %v186
    %v226 = vpack.c.b16 %v211, %v210
    %v227 = vpack.c.b16 %v213, %v212
    %v228 = vpack.c.b16 %v215, %v214
    %v229 = vpack.c.b16 %v217, %v216
    %v230 = vpack.c.b16 %v219, %v218
    %v231 = vpack.c.b16 %v221, %v220
    %v232 = vpack.c.b16 %v223, %v222
    %v233 = vpack.c.b16 %v225, %v224
    %v241 = vunpack.c.l.b16 %v187
    %v242 = vunpack.c.l.b16 %v188
    %v243 = vunpack.c.l.b16 %v189
    %v244 = vunpack.c.l.b16 %v190
    %v245 = vunpack.c.l.b16 %v191
    %v246 = vunpack.c.l.b16 %v192
    %v247 = vunpack.c.l.b16 %v193
    %v248 = vpack.c.b16 %v242, %v241
    %v249 = vpack.c.b16 %v244, %v243
    %v250 = vpack.c.b16 %v246, %v245
    %v251 = vpack.c.b16 %v247, %v247
    %vm255 = vcmask 408576
    %v257 = vsel %vm255, %v226, 0
    %v260 = vsel %vm255, %v227, 0
    %v263 = vsel %vm255, %v228, 0
    %v266 = vsel %vm255, %v229, 0
    %v269 = vsel %vm255, %v230, 0
    %v272 = vsel %vm255, %v231, 0
    %v275 = vsel %vm255, %v232, 0
    %v278 = vsel %vm255, %v233, 0
    %vm280 = vcmask 1040384
    %v282 = vsel %vm280, %v251, 0
    %284 = vmatpush.bf16.msra.mxu0 0
    %285 = vmatpush.bf16.msra.mxu0 0
    %286 = vmatpush.bf16.msra.mxu0 0
    %287 = vmatpush.bf16.msra.mxu0 0
    %288 = vmatpush.bf16.msra.mxu0 %v282
    %289 = vmatpush.bf16.msra.mxu0 %v250
    %290 = vmatpush.bf16.msra.mxu0 %v249
    %291 = vmatpush.bf16.msra.mxu0 %v248
    %292 = vmatmul.bf16.gmra.mxu0 %v257
    %v293 = vpop.f32.mrf.mxu0
    %v294 = vadd.f32 0.0, %v293
    %v295 = vpop.f32.mrf.mxu0
    %v296 = vadd.f32 0.0, %v295
    %297 = vmatmul.bf16.gmra.mxu0 %v260
    %v298 = vpop.f32.mrf.mxu0
    %v299 = vadd.f32 0.0, %v298
    %v300 = vpop.f32.mrf.mxu0
    %v301 = vadd.f32 0.0, %v300
    %302 = vmatmul.bf16.gmra.mxu0 %v263
    %v303 = vpop.f32.mrf.mxu0
    %v304 = vadd.f32 0.0, %v303
    %v305 = vpop.f32.mrf.mxu0
    %v306 = vadd.f32 0.0, %v305
    %307 = vmatmul.bf16.gmra.mxu0 %v266
    %v308 = vpop.f32.mrf.mxu0
    %v309 = vadd.f32 0.0, %v308
    %v310 = vpop.f32.mrf.mxu0
    %v311 = vadd.f32 0.0, %v310
    %312 = vmatmul.bf16.gmra.mxu0 %v269
    %v313 = vpop.f32.mrf.mxu0
    %v314 = vadd.f32 0.0, %v313
    %v315 = vpop.f32.mrf.mxu0
    %v316 = vadd.f32 0.0, %v315
    %317 = vmatmul.bf16.gmra.mxu0 %v272
    %v318 = vpop.f32.mrf.mxu0
    %v319 = vadd.f32 0.0, %v318
    %v320 = vpop.f32.mrf.mxu0
    %v321 = vadd.f32 0.0, %v320
    %322 = vmatmul.bf16.gmra.mxu0 %v275
    %v323 = vpop.f32.mrf.mxu0
    %v324 = vadd.f32 0.0, %v323
    %v325 = vpop.f32.mrf.mxu0
    %v326 = vadd.f32 0.0, %v325
    %327 = vmatmul.bf16.gmra.mxu0 %v278
    %v328 = vpop.f32.mrf.mxu0
    %v329 = vadd.f32 0.0, %v328
    %v330 = vpop.f32.mrf.mxu0
    %v331 = vadd.f32 0.0, %v330
    %332 = vdwg.mxu0
    %333 = vst [vmem:[#allocation2] sm:$0x1] 0.0
    %334 = vst [vmem:[#allocation2 + $0x18] sm:$0x1] 0.0
    %335 = vst [vmem:[#allocation2 + $0x30] sm:$0x1] 0.0
    %336 = vst [vmem:[#allocation2 + $0x48] sm:$0x1] 0.0
    %337 = vst [vmem:[#allocation2 + $0x60] sm:$0x1] 0.0
    %338 = vst [vmem:[#allocation2 + $0x78] sm:$0x1] 0.0
    %339 = vst [vmem:[#allocation2 + $0x90] sm:$0x1] 0.0
    %340 = vst [vmem:[#allocation2 + $0xa8] sm:$0x1] 0.0
    %341 = vst [vmem:[#allocation2 + $0x11] sm:$0x1] 0.0
    %342 = vst [vmem:[#allocation2 + $0x29] sm:$0x1] 0.0
    %343 = vst [vmem:[#allocation2 + $0x41] sm:$0x1] 0.0
    %344 = vst [vmem:[#allocation2 + $0x59] sm:$0x1] 0.0
    %345 = vst [vmem:[#allocation2 + $0x71] sm:$0x1] 0.0
    %346 = vst [vmem:[#allocation2 + $0x89] sm:$0x1] 0.0
    %347 = vst [vmem:[#allocation2 + $0xa1] sm:$0x1] 0.0
    %348 = vst [vmem:[#allocation2 + $0xb9] sm:$0x1] 0.0
    %349 = vst [vmem:[#allocation2 + $0x1] sm:$0xff] %v294
    %350 = vst [vmem:[#allocation2 + $0x9] sm:$0xff] %v296
    %351 = vst [vmem:[#allocation2 + $0x19] sm:$0xff] %v299
    %352 = vst [vmem:[#allocation2 + $0x21] sm:$0xff] %v301
    %353 = vst [vmem:[#allocation2 + $0x31] sm:$0xff] %v304
    %354 = vst [vmem:[#allocation2 + $0x39] sm:$0xff] %v306
    %355 = vst [vmem:[#allocation2 + $0x49] sm:$0xff] %v309
    %356 = vst [vmem:[#allocation2 + $0x51] sm:$0xff] %v311
    %357 = vst [vmem:[#allocation2 + $0x61] sm:$0xff] %v314
    %358 = vst [vmem:[#allocation2 + $0x69] sm:$0xff] %v316
    %359 = vst [vmem:[#allocation2 + $0x79] sm:$0xff] %v319
    %360 = vst [vmem:[#allocation2 + $0x81] sm:$0xff] %v321
    %361 = vst [vmem:[#allocation2 + $0x91] sm:$0xff] %v324
    %362 = vst [vmem:[#allocation2 + $0x99] sm:$0xff] %v326
    %363 = vst [vmem:[#allocation2 + $0xa9] sm:$0xff] %v329
    %364 = vst [vmem:[#allocation2 + $0xb1] sm:$0xff] %v331
    %v365 = vld [vmem:[#allocation2] sm:$0xff]
    %v366 = vld [vmem:[#allocation2 + $0x8] sm:$0xff]
    %v367 = vld [vmem:[#allocation2 + $0x18] sm:$0xff]
    %v368 = vld [vmem:[#allocation2 + $0x20] sm:$0xff]
    %v369 = vld [vmem:[#allocation2 + $0x30] sm:$0xff]
    %v370 = vld [vmem:[#allocation2 + $0x38] sm:$0xff]
    %v371 = vld [vmem:[#allocation2 + $0x48] sm:$0xff]
    %v372 = vld [vmem:[#allocation2 + $0x50] sm:$0xff]
    %v373 = vld [vmem:[#allocation2 + $0x60] sm:$0xff]
    %v374 = vld [vmem:[#allocation2 + $0x68] sm:$0xff]
    %v375 = vld [vmem:[#allocation2 + $0x78] sm:$0xff]
    %v376 = vld [vmem:[#allocation2 + $0x80] sm:$0xff]
    %v377 = vld [vmem:[#allocation2 + $0x90] sm:$0xff]
    %v378 = vld [vmem:[#allocation2 + $0x98] sm:$0xff]
    %v379 = vld [vmem:[#allocation2 + $0xa8] sm:$0xff]
    %v380 = vld [vmem:[#allocation2 + $0xb0] sm:$0xff]
    %v381 = vpack.c.bf16 %v365, %v365
    %v382 = vpack.c.bf16 %v366, %v366
    %v383 = vpack.c.bf16 %v367, %v367
    %v384 = vpack.c.bf16 %v368, %v368
    %v385 = vpack.c.bf16 %v369, %v369
    %v386 = vpack.c.bf16 %v370, %v370
    %v387 = vpack.c.bf16 %v371, %v371
    %v388 = vpack.c.bf16 %v372, %v372
    %v389 = vpack.c.bf16 %v373, %v373
    %v390 = vpack.c.bf16 %v374, %v374
    %v391 = vpack.c.bf16 %v375, %v375
    %v392 = vpack.c.bf16 %v376, %v376
    %v393 = vpack.c.bf16 %v377, %v377
    %v394 = vpack.c.bf16 %v378, %v378
    %v395 = vpack.c.bf16 %v379, %v379
    %v396 = vpack.c.bf16 %v380, %v380
    %v397 = vld [vmem:[#allocation2 + $0x1] sm:$0xff]
    %v398 = vld [vmem:[#allocation2 + $0x9] sm:$0xff]
    %v399 = vld [vmem:[#allocation2 + $0x19] sm:$0xff]
    %v400 = vld [vmem:[#allocation2 + $0x21] sm:$0xff]
    %v401 = vld [vmem:[#allocation2 + $0x31] sm:$0xff]
    %v402 = vld [vmem:[#allocation2 + $0x39] sm:$0xff]
    %v403 = vld [vmem:[#allocation2 + $0x49] sm:$0xff]
    %v404 = vld [vmem:[#allocation2 + $0x51] sm:$0xff]
    %v405 = vld [vmem:[#allocation2 + $0x61] sm:$0xff]
    %v406 = vld [vmem:[#allocation2 + $0x69] sm:$0xff]
    %v407 = vld [vmem:[#allocation2 + $0x79] sm:$0xff]
    %v408 = vld [vmem:[#allocation2 + $0x81] sm:$0xff]
    %v409 = vld [vmem:[#allocation2 + $0x91] sm:$0xff]
    %v410 = vld [vmem:[#allocation2 + $0x99] sm:$0xff]
    %v411 = vld [vmem:[#allocation2 + $0xa9] sm:$0xff]
    %v412 = vld [vmem:[#allocation2 + $0xb1] sm:$0xff]
    %v413 = vpack.c.bf16 %v397, %v397
    %v414 = vpack.c.bf16 %v398, %v398
    %v415 = vpack.c.bf16 %v399, %v399
    %v416 = vpack.c.bf16 %v400, %v400
    %v417 = vpack.c.bf16 %v401, %v401
    %v418 = vpack.c.bf16 %v402, %v402
    %v419 = vpack.c.bf16 %v403, %v403
    %v420 = vpack.c.bf16 %v404, %v404
    %v421 = vpack.c.bf16 %v405, %v405
    %v422 = vpack.c.bf16 %v406, %v406
    %v423 = vpack.c.bf16 %v407, %v407
    %v424 = vpack.c.bf16 %v408, %v408
    %v425 = vpack.c.bf16 %v409, %v409
    %v426 = vpack.c.bf16 %v410, %v410
    %v427 = vpack.c.bf16 %v411, %v411
    %v428 = vpack.c.bf16 %v412, %v412
    %v429 = vld [vmem:[#allocation2 + $0x2] sm:$0xff]
    %v430 = vld [vmem:[#allocation2 + $0xa] sm:$0xff]
    %v431 = vld [vmem:[#allocation2 + $0x1a] sm:$0xff]
    %v432 = vld [vmem:[#allocation2 + $0x22] sm:$0xff]
    %v433 = vld [vmem:[#allocation2 + $0x32] sm:$0xff]
    %v434 = vld [vmem:[#allocation2 + $0x3a] sm:$0xff]
    %v435 = vld [vmem:[#allocation2 + $0x4a] sm:$0xff]
    %v436 = vld [vmem:[#allocation2 + $0x52] sm:$0xff]
    %v437 = vld [vmem:[#allocation2 + $0x62] sm:$0xff]
    %v438 = vld [vmem:[#allocation2 + $0x6a] sm:$0xff]
    %v439 = vld [vmem:[#allocation2 + $0x7a] sm:$0xff]
    %v440 = vld [vmem:[#allocation2 + $0x82] sm:$0xff]
    %v441 = vld [vmem:[#allocation2 + $0x92] sm:$0xff]
    %v442 = vld [vmem:[#allocation2 + $0x9a] sm:$0xff]
    %v443 = vld [vmem:[#allocation2 + $0xaa] sm:$0xff]
    %v444 = vld [vmem:[#allocation2 + $0xb2] sm:$0xff]
    %v445 = vpack.c.bf16 %v429, %v429
    %v446 = vpack.c.bf16 %v430, %v430
    %v447 = vpack.c.bf16 %v431, %v431
    %v448 = vpack.c.bf16 %v432, %v432
    %v449 = vpack.c.bf16 %v433, %v433
    %v450 = vpack.c.bf16 %v434, %v434
    %v451 = vpack.c.bf16 %v435, %v435
    %v452 = vpack.c.bf16 %v436, %v436
    %v453 = vpack.c.bf16 %v437, %v437
    %v454 = vpack.c.bf16 %v438, %v438
    %v455 = vpack.c.bf16 %v439, %v439
    %v456 = vpack.c.bf16 %v440, %v440
    %v457 = vpack.c.bf16 %v441, %v441
    %v458 = vpack.c.bf16 %v442, %v442
    %v459 = vpack.c.bf16 %v443, %v443
    %v460 = vpack.c.bf16 %v444, %v444
    %v477 = vunpack.c.l.b16 %v381
    %v478 = vunpack.c.l.b16 %v382
    %v479 = vunpack.c.l.b16 %v383
    %v480 = vunpack.c.l.b16 %v384
    %v481 = vunpack.c.l.b16 %v385
    %v482 = vunpack.c.l.b16 %v386
    %v483 = vunpack.c.l.b16 %v387
    %v484 = vunpack.c.l.b16 %v388
    %v485 = vunpack.c.l.b16 %v389
    %v486 = vunpack.c.l.b16 %v390
    %v487 = vunpack.c.l.b16 %v391
    %v488 = vunpack.c.l.b16 %v392
    %v489 = vunpack.c.l.b16 %v393
    %v490 = vunpack.c.l.b16 %v394
    %v491 = vunpack.c.l.b16 %v395
    %v492 = vunpack.c.l.b16 %v396
    %v493 = vpack.c.b16 %v478, %v477
    %v494 = vpack.c.b16 %v480, %v479
    %v495 = vpack.c.b16 %v482, %v481
    %v496 = vpack.c.b16 %v484, %v483
    %v497 = vpack.c.b16 %v486, %v485
    %v498 = vpack.c.b16 %v488, %v487
    %v499 = vpack.c.b16 %v490, %v489
    %v500 = vpack.c.b16 %v492, %v491
    %v525 = vunpack.c.l.b16 %v413
    %v526 = vunpack.c.l.b16 %v414
    %v527 = vunpack.c.l.b16 %v415
    %v528 = vunpack.c.l.b16 %v416
    %v529 = vunpack.c.l.b16 %v417
    %v530 = vunpack.c.l.b16 %v418
    %v531 = vunpack.c.l.b16 %v419
    %v532 = vunpack.c.l.b16 %v420
    %v533 = vunpack.c.l.b16 %v421
    %v534 = vunpack.c.l.b16 %v422
    %v535 = vunpack.c.l.b16 %v423
    %v536 = vunpack.c.l.b16 %v424
    %v537 = vunpack.c.l.b16 %v425
    %v538 = vunpack.c.l.b16 %v426
    %v539 = vunpack.c.l.b16 %v427
    %v540 = vunpack.c.l.b16 %v428
    %v541 = vpack.c.b16 %v526, %v525
    %v542 = vpack.c.b16 %v528, %v527
    %v543 = vpack.c.b16 %v530, %v529
    %v544 = vpack.c.b16 %v532, %v531
    %v545 = vpack.c.b16 %v534, %v533
    %v546 = vpack.c.b16 %v536, %v535
    %v547 = vpack.c.b16 %v538, %v537
    %v548 = vpack.c.b16 %v540, %v539
    %v573 = vunpack.c.l.b16 %v445
    %v574 = vunpack.c.l.b16 %v446
    %v575 = vunpack.c.l.b16 %v447
    %v576 = vunpack.c.l.b16 %v448
    %v577 = vunpack.c.l.b16 %v449
    %v578 = vunpack.c.l.b16 %v450
    %v579 = vunpack.c.l.b16 %v451
    %v580 = vunpack.c.l.b16 %v452
    %v581 = vunpack.c.l.b16 %v453
    %v582 = vunpack.c.l.b16 %v454
    %v583 = vunpack.c.l.b16 %v455
    %v584 = vunpack.c.l.b16 %v456
    %v585 = vunpack.c.l.b16 %v457
    %v586 = vunpack.c.l.b16 %v458
    %v587 = vunpack.c.l.b16 %v459
    %v588 = vunpack.c.l.b16 %v460
    %v589 = vpack.c.b16 %v574, %v573
    %v590 = vpack.c.b16 %v576, %v575
    %v591 = vpack.c.b16 %v578, %v577
    %v592 = vpack.c.b16 %v580, %v579
    %v593 = vpack.c.b16 %v582, %v581
    %v594 = vpack.c.b16 %v584, %v583
    %v595 = vpack.c.b16 %v586, %v585
    %v596 = vpack.c.b16 %v588, %v587
    %v605 = vld [vmem:[#allocation3] sm:$0xf]
    %v606 = vld [vmem:[#allocation3 + $0x4] sm:$0xf]
    %v607 = vld [vmem:[#allocation3 + $0x8] sm:$0xf]
    %v608 = vld [vmem:[#allocation3 + $0xc] sm:$0xf]
    %v609 = vld [vmem:[#allocation3 + $0x10] sm:$0xf]
    %v610 = vld [vmem:[#allocation3 + $0x14] sm:$0xf]
    %v611 = vld [vmem:[#allocation3 + $0x18] sm:$0xf]
    %v612 = vld [vmem:[#allocation3 + $0x1c] sm:$0xf]
    %v613 = vld [vmem:[#allocation3 + $0x20] sm:$0xf]
    %v614 = vld [vmem:[#allocation3 + $0x24] sm:$0xf]
    %v615 = vld [vmem:[#allocation3 + $0x28] sm:$0xf]
    %v616 = vld [vmem:[#allocation3 + $0x2c] sm:$0xf]
    %v617 = vld [vmem:[#allocation3 + $0x30] sm:$0xf]
    %v618 = vld [vmem:[#allocation3 + $0x34] sm:$0xf]
    %v619 = vld [vmem:[#allocation3 + $0x38] sm:$0xf]
    %v620 = vld [vmem:[#allocation3 + $0x3c] sm:$0xf]
    %v621 = vld [vmem:[#allocation3 + $0x40] sm:$0xf]
    %v622 = vld [vmem:[#allocation3 + $0x44] sm:$0xf]
    %v623 = vld [vmem:[#allocation3 + $0x48] sm:$0xf]
    %v624 = vld [vmem:[#allocation3 + $0x4c] sm:$0xf]
    %v625 = vld [vmem:[#allocation3 + $0x50] sm:$0xf]
    %v626 = vld [vmem:[#allocation3 + $0x54] sm:$0xf]
    %v627 = vld [vmem:[#allocation3 + $0x58] sm:$0xf]
    %v628 = vld [vmem:[#allocation3 + $0x5c] sm:$0xf]
    %v629 = vld [vmem:[#allocation3 + $0x60] sm:$0xf]
    %v630 = vld [vmem:[#allocation3 + $0x64] sm:$0xf]
    %v631 = vld [vmem:[#allocation3 + $0x68] sm:$0xf]
    %v632 = vld [vmem:[#allocation3 + $0x6c] sm:$0xf]
    %v633 = vld [vmem:[#allocation3 + $0x70] sm:$0xf]
    %v634 = vld [vmem:[#allocation3 + $0x74] sm:$0xf]
    %v635 = vld [vmem:[#allocation3 + $0x78] sm:$0xf]
    %v636 = vld [vmem:[#allocation3 + $0x7c] sm:$0xf]
    %v637 = vld [vmem:[#allocation3 + $0x80] sm:$0xf]
    %v638 = vld [vmem:[#allocation3 + $0x84] sm:$0xf]
    %v639 = vld [vmem:[#allocation3 + $0x88] sm:$0xf]
    %v640 = vld [vmem:[#allocation3 + $0x8c] sm:$0xf]
    %v641 = vld [vmem:[#allocation3 + $0x90] sm:$0xf]
    %v642 = vld [vmem:[#allocation3 + $0x94] sm:$0xf]
    %v643 = vld [vmem:[#allocation3 + $0x98] sm:$0xf]
    %v644 = vld [vmem:[#allocation3 + $0x9c] sm:$0xf]
    %v645 = vld [vmem:[#allocation3 + $0xa0] sm:$0xf]
    %v646 = vld [vmem:[#allocation3 + $0xa4] sm:$0xf]
    %v647 = vld [vmem:[#allocation3 + $0xa8] sm:$0xf]
    %v648 = vld [vmem:[#allocation3 + $0xac] sm:$0xf]
    %v649 = vld [vmem:[#allocation3 + $0xb0] sm:$0xf]
    %v650 = vld [vmem:[#allocation3 + $0xb4] sm:$0xf]
    %v651 = vld [vmem:[#allocation3 + $0xb8] sm:$0xf]
    %v652 = vld [vmem:[#allocation3 + $0xbc] sm:$0xf]
    %v653 = vld [vmem:[%s3] sm:$0x1]
    %v655 = vperm.slane %v653, 0
    %v705 = vunpack.c.l.b16 %v605
    %v706 = vunpack.c.l.b16 %v606
    %v707 = vunpack.c.l.b16 %v607
    %v708 = vunpack.c.l.b16 %v608
    %v709 = vunpack.c.l.b16 %v609
    %v710 = vunpack.c.l.b16 %v610
    %v711 = vunpack.c.l.b16 %v611
    %v712 = vunpack.c.l.b16 %v612
    %v713 = vunpack.c.l.b16 %v613
    %v714 = vunpack.c.l.b16 %v614
    %v715 = vunpack.c.l.b16 %v615
    %v716 = vunpack.c.l.b16 %v616
    %v717 = vunpack.c.l.b16 %v617
    %v718 = vunpack.c.l.b16 %v618
    %v719 = vunpack.c.l.b16 %v619
    %v720 = vunpack.c.l.b16 %v620
    %v721 = vunpack.c.l.b16 %v621
    %v722 = vunpack.c.l.b16 %v622
    %v723 = vunpack.c.l.b16 %v623
    %v724 = vunpack.c.l.b16 %v624
    %v725 = vunpack.c.l.b16 %v625
    %v726 = vunpack.c.l.b16 %v626
    %v727 = vunpack.c.l.b16 %v627
    %v728 = vunpack.c.l.b16 %v628
    %v729 = vunpack.c.l.b16 %v629
    %v730 = vunpack.c.l.b16 %v630
    %v731 = vunpack.c.l.b16 %v631
    %v732 = vunpack.c.l.b16 %v632
    %v733 = vunpack.c.l.b16 %v633
    %v734 = vunpack.c.l.b16 %v634
    %v735 = vunpack.c.l.b16 %v635
    %v736 = vunpack.c.l.b16 %v636
    %v737 = vunpack.c.l.b16 %v637
    %v738 = vunpack.c.l.b16 %v638
    %v739 = vunpack.c.l.b16 %v639
    %v740 = vunpack.c.l.b16 %v640
    %v741 = vunpack.c.l.b16 %v641
    %v742 = vunpack.c.l.b16 %v642
    %v743 = vunpack.c.l.b16 %v643
    %v744 = vunpack.c.l.b16 %v644
    %v745 = vunpack.c.l.b16 %v645
    %v746 = vunpack.c.l.b16 %v646
    %v747 = vunpack.c.l.b16 %v647
    %v748 = vunpack.c.l.b16 %v648
    %v749 = vunpack.c.l.b16 %v649
    %v750 = vunpack.c.l.b16 %v650
    %v751 = vunpack.c.l.b16 %v651
    %v752 = vunpack.c.l.b16 %v652
    %v753 = vpack.c.b16 %v706, %v705
    %v754 = vpack.c.b16 %v708, %v707
    %v755 = vpack.c.b16 %v710, %v709
    %v756 = vpack.c.b16 %v712, %v711
    %v757 = vpack.c.b16 %v714, %v713
    %v758 = vpack.c.b16 %v716, %v715
    %v759 = vpack.c.b16 %v718, %v717
    %v760 = vpack.c.b16 %v720, %v719
    %v761 = vpack.c.b16 %v722, %v721
    %v762 = vpack.c.b16 %v724, %v723
    %v763 = vpack.c.b16 %v726, %v725
    %v764 = vpack.c.b16 %v728, %v727
    %v765 = vpack.c.b16 %v730, %v729
    %v766 = vpack.c.b16 %v732, %v731
    %v767 = vpack.c.b16 %v734, %v733
    %v768 = vpack.c.b16 %v736, %v735
    %v769 = vpack.c.b16 %v738, %v737
    %v770 = vpack.c.b16 %v740, %v739
    %v771 = vpack.c.b16 %v742, %v741
    %v772 = vpack.c.b16 %v744, %v743
    %v773 = vpack.c.b16 %v746, %v745
    %v774 = vpack.c.b16 %v748, %v747
    %v775 = vpack.c.b16 %v750, %v749
    %v776 = vpack.c.b16 %v752, %v751
    %801 = vmatpush.bf16.msra.mxu0 %v760
    %802 = vmatpush.bf16.msra.mxu0 %v759
    %803 = vmatpush.bf16.msra.mxu0 %v758
    %804 = vmatpush.bf16.msra.mxu0 %v757
    %805 = vmatpush.bf16.msra.mxu0 %v756
    %806 = vmatpush.bf16.msra.mxu0 %v755
    %807 = vmatpush.bf16.msra.mxu0 %v754
    %808 = vmatpush.bf16.msra.mxu0 %v753
    %809 = vmatmul.bf16.gmra.mxu0 %v493
    %v810 = vpop.f32.mrf.mxu0
    %v811 = vadd.f32 %v655, %v810
    %v812 = vpop.f32.mrf.mxu0
    %v813 = vadd.f32 %v655, %v812
    %814 = vmatmul.bf16.gmra.mxu0 %v494
    %v815 = vpop.f32.mrf.mxu0
    %v816 = vadd.f32 %v655, %v815
    %v817 = vpop.f32.mrf.mxu0
    %v818 = vadd.f32 %v655, %v817
    %819 = vmatmul.bf16.gmra.mxu0 %v495
    %v820 = vpop.f32.mrf.mxu0
    %v821 = vadd.f32 %v655, %v820
    %v822 = vpop.f32.mrf.mxu0
    %v823 = vadd.f32 %v655, %v822
    %824 = vmatmul.bf16.gmra.mxu0 %v496
    %v825 = vpop.f32.mrf.mxu0
    %v826 = vadd.f32 %v655, %v825
    %v827 = vpop.f32.mrf.mxu0
    %v828 = vadd.f32 %v655, %v827
    %829 = vmatmul.bf16.gmra.mxu0 %v497
    %v830 = vpop.f32.mrf.mxu0
    %v831 = vadd.f32 %v655, %v830
    %v832 = vpop.f32.mrf.mxu0
    %v833 = vadd.f32 %v655, %v832
    %834 = vmatmul.bf16.gmra.mxu0 %v498
    %v835 = vpop.f32.mrf.mxu0
    %v836 = vadd.f32 %v655, %v835
    %v837 = vpop.f32.mrf.mxu0
    %v838 = vadd.f32 %v655, %v837
    %839 = vmatmul.bf16.gmra.mxu0 %v499
    %v840 = vpop.f32.mrf.mxu0
    %v841 = vadd.f32 %v655, %v840
    %v842 = vpop.f32.mrf.mxu0
    %v843 = vadd.f32 %v655, %v842
    %844 = vmatmul.bf16.gmra.mxu0 %v500
    %v845 = vpop.f32.mrf.mxu0
    %v846 = vadd.f32 %v655, %v845
    %v847 = vpop.f32.mrf.mxu0
    %v848 = vadd.f32 %v655, %v847
    %849 = vdwg.mxu0
    %850 = vmatpush.bf16.msra.mxu0 %v768
    %851 = vmatpush.bf16.msra.mxu0 %v767
    %852 = vmatpush.bf16.msra.mxu0 %v766
    %853 = vmatpush.bf16.msra.mxu0 %v765
    %854 = vmatpush.bf16.msra.mxu0 %v764
    %855 = vmatpush.bf16.msra.mxu0 %v763
    %856 = vmatpush.bf16.msra.mxu0 %v762
    %857 = vmatpush.bf16.msra.mxu0 %v761
    %858 = vmatmul.bf16.gmra.mxu0 %v541
    %v859 = vpop.f32.mrf.mxu0
    %v860 = vadd.f32 %v811, %v859
    %v861 = vpop.f32.mrf.mxu0
    %v862 = vadd.f32 %v813, %v861
    %863 = vmatmul.bf16.gmra.mxu0 %v542
    %v864 = vpop.f32.mrf.mxu0
    %v865 = vadd.f32 %v816, %v864
    %v866 = vpop.f32.mrf.mxu0
    %v867 = vadd.f32 %v818, %v866
    %868 = vmatmul.bf16.gmra.mxu0 %v543
    %v869 = vpop.f32.mrf.mxu0
    %v870 = vadd.f32 %v821, %v869
    %v871 = vpop.f32.mrf.mxu0
    %v872 = vadd.f32 %v823, %v871
    %873 = vmatmul.bf16.gmra.mxu0 %v544
    %v874 = vpop.f32.mrf.mxu0
    %v875 = vadd.f32 %v826, %v874
    %v876 = vpop.f32.mrf.mxu0
    %v877 = vadd.f32 %v828, %v876
    %878 = vmatmul.bf16.gmra.mxu0 %v545
    %v879 = vpop.f32.mrf.mxu0
    %v880 = vadd.f32 %v831, %v879
    %v881 = vpop.f32.mrf.mxu0
    %v882 = vadd.f32 %v833, %v881
    %883 = vmatmul.bf16.gmra.mxu0 %v546
    %v884 = vpop.f32.mrf.mxu0
    %v885 = vadd.f32 %v836, %v884
    %v886 = vpop.f32.mrf.mxu0
    %v887 = vadd.f32 %v838, %v886
    %888 = vmatmul.bf16.gmra.mxu0 %v547
    %v889 = vpop.f32.mrf.mxu0
    %v890 = vadd.f32 %v841, %v889
    %v891 = vpop.f32.mrf.mxu0
    %v892 = vadd.f32 %v843, %v891
    %893 = vmatmul.bf16.gmra.mxu0 %v548
    %v894 = vpop.f32.mrf.mxu0
    %v895 = vadd.f32 %v846, %v894
    %v896 = vpop.f32.mrf.mxu0
    %v897 = vadd.f32 %v848, %v896
    %898 = vdwg.mxu0
    %899 = vmatpush.bf16.msra.mxu0 %v776
    %900 = vmatpush.bf16.msra.mxu0 %v775
    %901 = vmatpush.bf16.msra.mxu0 %v774
    %902 = vmatpush.bf16.msra.mxu0 %v773
    %903 = vmatpush.bf16.msra.mxu0 %v772
    %904 = vmatpush.bf16.msra.mxu0 %v771
    %905 = vmatpush.bf16.msra.mxu0 %v770
    %906 = vmatpush.bf16.msra.mxu0 %v769
    %907 = vmatmul.bf16.gmra.mxu0 %v589
    %v908 = vpop.f32.mrf.mxu0
    %v909 = vadd.f32 %v860, %v908
    %v910 = vpop.f32.mrf.mxu0
    %v911 = vadd.f32 %v862, %v910
    %912 = vmatmul.bf16.gmra.mxu0 %v590
    %v913 = vpop.f32.mrf.mxu0
    %v914 = vadd.f32 %v865, %v913
    %v915 = vpop.f32.mrf.mxu0
    %v916 = vadd.f32 %v867, %v915
    %917 = vmatmul.bf16.gmra.mxu0 %v591
    %v918 = vpop.f32.mrf.mxu0
    %v919 = vadd.f32 %v870, %v918
    %v920 = vpop.f32.mrf.mxu0
    %v921 = vadd.f32 %v872, %v920
    %922 = vmatmul.bf16.gmra.mxu0 %v592
    %v923 = vpop.f32.mrf.mxu0
    %v924 = vadd.f32 %v875, %v923
    %v925 = vpop.f32.mrf.mxu0
    %v926 = vadd.f32 %v877, %v925
    %927 = vmatmul.bf16.gmra.mxu0 %v593
    %v928 = vpop.f32.mrf.mxu0
    %v929 = vadd.f32 %v880, %v928
    %v930 = vpop.f32.mrf.mxu0
    %v931 = vadd.f32 %v882, %v930
    %932 = vmatmul.bf16.gmra.mxu0 %v594
    %v933 = vpop.f32.mrf.mxu0
    %v934 = vadd.f32 %v885, %v933
    %v935 = vpop.f32.mrf.mxu0
    %v936 = vadd.f32 %v887, %v935
    %937 = vmatmul.bf16.gmra.mxu0 %v595
    %v938 = vpop.f32.mrf.mxu0
    %v939 = vadd.f32 %v890, %v938
    %v940 = vpop.f32.mrf.mxu0
    %v941 = vadd.f32 %v892, %v940
    %942 = vmatmul.bf16.gmra.mxu0 %v596
    %v943 = vpop.f32.mrf.mxu0
    %v944 = vadd.f32 %v895, %v943
    %v945 = vpop.f32.mrf.mxu0
    %v946 = vadd.f32 %v897, %v945
    %947 = vdwg.mxu0
    %v948 = vmax.f32 %v909, 0.0
    %v949 = vmax.f32 %v911, 0.0
    %v950 = vmax.f32 %v914, 0.0
    %v951 = vmax.f32 %v916, 0.0
    %v952 = vmax.f32 %v919, 0.0
    %v953 = vmax.f32 %v921, 0.0
    %v954 = vmax.f32 %v924, 0.0
    %v955 = vmax.f32 %v926, 0.0
    %v956 = vmax.f32 %v929, 0.0
    %v957 = vmax.f32 %v931, 0.0
    %v958 = vmax.f32 %v934, 0.0
    %v959 = vmax.f32 %v936, 0.0
    %v960 = vmax.f32 %v939, 0.0
    %v961 = vmax.f32 %v941, 0.0
    %v962 = vmax.f32 %v944, 0.0
    %v963 = vmax.f32 %v946, 0.0
    %964 = vst [vmem:[#allocation2 + $0x1] sm:$0xff] %v948
    %965 = vst [vmem:[#allocation2 + $0x9] sm:$0xff] %v949
    %966 = vst [vmem:[#allocation2 + $0x19] sm:$0xff] %v950
    %967 = vst [vmem:[#allocation2 + $0x21] sm:$0xff] %v951
    %968 = vst [vmem:[#allocation2 + $0x31] sm:$0xff] %v952
    %969 = vst [vmem:[#allocation2 + $0x39] sm:$0xff] %v953
    %970 = vst [vmem:[#allocation2 + $0x49] sm:$0xff] %v954
    %971 = vst [vmem:[#allocation2 + $0x51] sm:$0xff] %v955
    %972 = vst [vmem:[#allocation2 + $0x61] sm:$0xff] %v956
    %973 = vst [vmem:[#allocation2 + $0x69] sm:$0xff] %v957
    %974 = vst [vmem:[#allocation2 + $0x79] sm:$0xff] %v958
    %975 = vst [vmem:[#allocation2 + $0x81] sm:$0xff] %v959
    %976 = vst [vmem:[#allocation2 + $0x91] sm:$0xff] %v960
    %977 = vst [vmem:[#allocation2 + $0x99] sm:$0xff] %v961
    %978 = vst [vmem:[#allocation2 + $0xa9] sm:$0xff] %v962
    %979 = vst [vmem:[#allocation2 + $0xb1] sm:$0xff] %v963
    %v980 = vld [vmem:[#allocation2] sm:$0xff]
    %v981 = vld [vmem:[#allocation2 + $0x8] sm:$0xff]
    %v982 = vld [vmem:[#allocation2 + $0x18] sm:$0xff]
    %v983 = vld [vmem:[#allocation2 + $0x20] sm:$0xff]
    %v984 = vld [vmem:[#allocation2 + $0x30] sm:$0xff]
    %v985 = vld [vmem:[#allocation2 + $0x38] sm:$0xff]
    %v986 = vld [vmem:[#allocation2 + $0x48] sm:$0xff]
    %v987 = vld [vmem:[#allocation2 + $0x50] sm:$0xff]
    %v988 = vld [vmem:[#allocation2 + $0x60] sm:$0xff]
    %v989 = vld [vmem:[#allocation2 + $0x68] sm:$0xff]
    %v990 = vld [vmem:[#allocation2 + $0x78] sm:$0xff]
    %v991 = vld [vmem:[#allocation2 + $0x80] sm:$0xff]
    %v992 = vld [vmem:[#allocation2 + $0x90] sm:$0xff]
    %v993 = vld [vmem:[#allocation2 + $0x98] sm:$0xff]
    %v994 = vld [vmem:[#allocation2 + $0xa8] sm:$0xff]
    %v995 = vld [vmem:[#allocation2 + $0xb0] sm:$0xff]
    %v996 = vpack.c.bf16 %v980, %v980
    %v997 = vpack.c.bf16 %v981, %v981
    %v998 = vpack.c.bf16 %v982, %v982
    %v999 = vpack.c.bf16 %v983, %v983
    %v1000 = vpack.c.bf16 %v984, %v984
    %v1001 = vpack.c.bf16 %v985, %v985
    %v1002 = vpack.c.bf16 %v986, %v986
    %v1003 = vpack.c.bf16 %v987, %v987
    %v1004 = vpack.c.bf16 %v988, %v988
    %v1005 = vpack.c.bf16 %v989, %v989
    %v1006 = vpack.c.bf16 %v990, %v990
    %v1007 = vpack.c.bf16 %v991, %v991
    %v1008 = vpack.c.bf16 %v992, %v992
    %v1009 = vpack.c.bf16 %v993, %v993
    %v1010 = vpack.c.bf16 %v994, %v994
    %v1011 = vpack.c.bf16 %v995, %v995
    %v1012 = vld [vmem:[#allocation2 + $0x1] sm:$0xff]
    %v1013 = vld [vmem:[#allocation2 + $0x9] sm:$0xff]
    %v1014 = vld [vmem:[#allocation2 + $0x19] sm:$0xff]
    %v1015 = vld [vmem:[#allocation2 + $0x21] sm:$0xff]
    %v1016 = vld [vmem:[#allocation2 + $0x31] sm:$0xff]
    %v1017 = vld [vmem:[#allocation2 + $0x39] sm:$0xff]
    %v1018 = vld [vmem:[#allocation2 + $0x49] sm:$0xff]
    %v1019 = vld [vmem:[#allocation2 + $0x51] sm:$0xff]
    %v1020 = vld [vmem:[#allocation2 + $0x61] sm:$0xff]
    %v1021 = vld [vmem:[#allocation2 + $0x69] sm:$0xff]
    %v1022 = vld [vmem:[#allocation2 + $0x79] sm:$0xff]
    %v1023 = vld [vmem:[#allocation2 + $0x81] sm:$0xff]
    %v1024 = vld [vmem:[#allocation2 + $0x91] sm:$0xff]
    %v1025 = vld [vmem:[#allocation2 + $0x99] sm:$0xff]
    %v1026 = vld [vmem:[#allocation2 + $0xa9] sm:$0xff]
    %v1027 = vld [vmem:[#allocation2 + $0xb1] sm:$0xff]
    %v1028 = vpack.c.bf16 %v1012, %v1012
    %v1029 = vpack.c.bf16 %v1013, %v1013
    %v1030 = vpack.c.bf16 %v1014, %v1014
    %v1031 = vpack.c.bf16 %v1015, %v1015
    %v1032 = vpack.c.bf16 %v1016, %v1016
    %v1033 = vpack.c.bf16 %v1017, %v1017
    %v1034 = vpack.c.bf16 %v1018, %v1018
    %v1035 = vpack.c.bf16 %v1019, %v1019
    %v1036 = vpack.c.bf16 %v1020, %v1020
    %v1037 = vpack.c.bf16 %v1021, %v1021
    %v1038 = vpack.c.bf16 %v1022, %v1022
    %v1039 = vpack.c.bf16 %v1023, %v1023
    %v1040 = vpack.c.bf16 %v1024, %v1024
    %v1041 = vpack.c.bf16 %v1025, %v1025
    %v1042 = vpack.c.bf16 %v1026, %v1026
    %v1043 = vpack.c.bf16 %v1027, %v1027
    %v1044 = vld [vmem:[#allocation2 + $0x2] sm:$0xff]
    %v1045 = vld [vmem:[#allocation2 + $0xa] sm:$0xff]
    %v1046 = vld [vmem:[#allocation2 + $0x1a] sm:$0xff]
    %v1047 = vld [vmem:[#allocation2 + $0x22] sm:$0xff]
    %v1048 = vld [vmem:[#allocation2 + $0x32] sm:$0xff]
    %v1049 = vld [vmem:[#allocation2 + $0x3a] sm:$0xff]
    %v1050 = vld [vmem:[#allocation2 + $0x4a] sm:$0xff]
    %v1051 = vld [vmem:[#allocation2 + $0x52] sm:$0xff]
    %v1052 = vld [vmem:[#allocation2 + $0x62] sm:$0xff]
    %v1053 = vld [vmem:[#allocation2 + $0x6a] sm:$0xff]
    %v1054 = vld [vmem:[#allocation2 + $0x7a] sm:$0xff]
    %v1055 = vld [vmem:[#allocation2 + $0x82] sm:$0xff]
    %v1056 = vld [vmem:[#allocation2 + $0x92] sm:$0xff]
    %v1057 = vld [vmem:[#allocation2 + $0x9a] sm:$0xff]
    %v1058 = vld [vmem:[#allocation2 + $0xaa] sm:$0xff]
    %v1059 = vld [vmem:[#allocation2 + $0xb2] sm:$0xff]
    %v1060 = vpack.c.bf16 %v1044, %v1044
    %v1061 = vpack.c.bf16 %v1045, %v1045
    %v1062 = vpack.c.bf16 %v1046, %v1046
    %v1063 = vpack.c.bf16 %v1047, %v1047
    %v1064 = vpack.c.bf16 %v1048, %v1048
    %v1065 = vpack.c.bf16 %v1049, %v1049
    %v1066 = vpack.c.bf16 %v1050, %v1050
    %v1067 = vpack.c.bf16 %v1051, %v1051
    %v1068 = vpack.c.bf16 %v1052, %v1052
    %v1069 = vpack.c.bf16 %v1053, %v1053
    %v1070 = vpack.c.bf16 %v1054, %v1054
    %v1071 = vpack.c.bf16 %v1055, %v1055
    %v1072 = vpack.c.bf16 %v1056, %v1056
    %v1073 = vpack.c.bf16 %v1057, %v1057
    %v1074 = vpack.c.bf16 %v1058, %v1058
    %v1075 = vpack.c.bf16 %v1059, %v1059
    %v1092 = vunpack.c.l.b16 %v996
    %v1093 = vunpack.c.l.b16 %v997
    %v1094 = vunpack.c.l.b16 %v998
    %v1095 = vunpack.c.l.b16 %v999
    %v1096 = vunpack.c.l.b16 %v1000
    %v1097 = vunpack.c.l.b16 %v1001
    %v1098 = vunpack.c.l.b16 %v1002
    %v1099 = vunpack.c.l.b16 %v1003
    %v1100 = vunpack.c.l.b16 %v1004
    %v1101 = vunpack.c.l.b16 %v1005
    %v1102 = vunpack.c.l.b16 %v1006
    %v1103 = vunpack.c.l.b16 %v1007
    %v1104 = vunpack.c.l.b16 %v1008
    %v1105 = vunpack.c.l.b16 %v1009
    %v1106 = vunpack.c.l.b16 %v1010
    %v1107 = vunpack.c.l.b16 %v1011
    %v1108 = vpack.c.b16 %v1093, %v1092
    %v1109 = vpack.c.b16 %v1095, %v1094
    %v1110 = vpack.c.b16 %v1097, %v1096
    %v1111 = vpack.c.b16 %v1099, %v1098
    %v1112 = vpack.c.b16 %v1101, %v1100
    %v1113 = vpack.c.b16 %v1103, %v1102
    %v1114 = vpack.c.b16 %v1105, %v1104
    %v1115 = vpack.c.b16 %v1107, %v1106
    %v1140 = vunpack.c.l.b16 %v1028
    %v1141 = vunpack.c.l.b16 %v1029
    %v1142 = vunpack.c.l.b16 %v1030
    %v1143 = vunpack.c.l.b16 %v1031
    %v1144 = vunpack.c.l.b16 %v1032
    %v1145 = vunpack.c.l.b16 %v1033
    %v1146 = vunpack.c.l.b16 %v1034
    %v1147 = vunpack.c.l.b16 %v1035
    %v1148 = vunpack.c.l.b16 %v1036
    %v1149 = vunpack.c.l.b16 %v1037
    %v1150 = vunpack.c.l.b16 %v1038
    %v1151 = vunpack.c.l.b16 %v1039
    %v1152 = vunpack.c.l.b16 %v1040
    %v1153 = vunpack.c.l.b16 %v1041
    %v1154 = vunpack.c.l.b16 %v1042
    %v1155 = vunpack.c.l.b16 %v1043
    %v1156 = vpack.c.b16 %v1141, %v1140
    %v1157 = vpack.c.b16 %v1143, %v1142
    %v1158 = vpack.c.b16 %v1145, %v1144
    %v1159 = vpack.c.b16 %v1147, %v1146
    %v1160 = vpack.c.b16 %v1149, %v1148
    %v1161 = vpack.c.b16 %v1151, %v1150
    %v1162 = vpack.c.b16 %v1153, %v1152
    %v1163 = vpack.c.b16 %v1155, %v1154
    %v1188 = vunpack.c.l.b16 %v1060
    %v1189 = vunpack.c.l.b16 %v1061
    %v1190 = vunpack.c.l.b16 %v1062
    %v1191 = vunpack.c.l.b16 %v1063
    %v1192 = vunpack.c.l.b16 %v1064
    %v1193 = vunpack.c.l.b16 %v1065
    %v1194 = vunpack.c.l.b16 %v1066
    %v1195 = vunpack.c.l.b16 %v1067
    %v1196 = vunpack.c.l.b16 %v1068
    %v1197 = vunpack.c.l.b16 %v1069
    %v1198 = vunpack.c.l.b16 %v1070
    %v1199 = vunpack.c.l.b16 %v1071
    %v1200 = vunpack.c.l.b16 %v1072
    %v1201 = vunpack.c.l.b16 %v1073
    %v1202 = vunpack.c.l.b16 %v1074
    %v1203 = vunpack.c.l.b16 %v1075
    %v1204 = vpack.c.b16 %v1189, %v1188
    %v1205 = vpack.c.b16 %v1191, %v1190
    %v1206 = vpack.c.b16 %v1193, %v1192
    %v1207 = vpack.c.b16 %v1195, %v1194
    %v1208 = vpack.c.b16 %v1197, %v1196
    %v1209 = vpack.c.b16 %v1199, %v1198
    %v1210 = vpack.c.b16 %v1201, %v1200
    %v1211 = vpack.c.b16 %v1203, %v1202
    %v1220 = vld [vmem:[#allocation6] sm:$0xf]
    %v1221 = vld [vmem:[#allocation6 + $0x4] sm:$0xf]
    %v1222 = vld [vmem:[#allocation6 + $0x8] sm:$0xf]
    %v1223 = vld [vmem:[#allocation6 + $0xc] sm:$0xf]
    %v1224 = vld [vmem:[#allocation6 + $0x10] sm:$0xf]
    %v1225 = vld [vmem:[#allocation6 + $0x14] sm:$0xf]
    %v1226 = vld [vmem:[#allocation6 + $0x18] sm:$0xf]
    %v1227 = vld [vmem:[#allocation6 + $0x1c] sm:$0xf]
    %v1228 = vld [vmem:[#allocation6 + $0x20] sm:$0xf]
    %v1229 = vld [vmem:[#allocation6 + $0x24] sm:$0xf]
    %v1230 = vld [vmem:[#allocation6 + $0x28] sm:$0xf]
    %v1231 = vld [vmem:[#allocation6 + $0x2c] sm:$0xf]
    %v1232 = vld [vmem:[#allocation6 + $0x30] sm:$0xf]
    %v1233 = vld [vmem:[#allocation6 + $0x34] sm:$0xf]
    %v1234 = vld [vmem:[#allocation6 + $0x38] sm:$0xf]
    %v1235 = vld [vmem:[#allocation6 + $0x3c] sm:$0xf]
    %v1236 = vld [vmem:[#allocation6 + $0x40] sm:$0xf]
    %v1237 = vld [vmem:[#allocation6 + $0x44] sm:$0xf]
    %v1238 = vld [vmem:[#allocation6 + $0x48] sm:$0xf]
    %v1239 = vld [vmem:[#allocation6 + $0x4c] sm:$0xf]
    %v1240 = vld [vmem:[#allocation6 + $0x50] sm:$0xf]
    %v1241 = vld [vmem:[#allocation6 + $0x54] sm:$0xf]
    %v1242 = vld [vmem:[#allocation6 + $0x58] sm:$0xf]
    %v1243 = vld [vmem:[#allocation6 + $0x5c] sm:$0xf]
    %v1244 = vld [vmem:[#allocation6 + $0x60] sm:$0xf]
    %v1245 = vld [vmem:[#allocation6 + $0x64] sm:$0xf]
    %v1246 = vld [vmem:[#allocation6 + $0x68] sm:$0xf]
    %v1247 = vld [vmem:[#allocation6 + $0x6c] sm:$0xf]
    %v1248 = vld [vmem:[#allocation6 + $0x70] sm:$0xf]
    %v1249 = vld [vmem:[#allocation6 + $0x74] sm:$0xf]
    %v1250 = vld [vmem:[#allocation6 + $0x78] sm:$0xf]
    %v1251 = vld [vmem:[#allocation6 + $0x7c] sm:$0xf]
    %v1252 = vld [vmem:[#allocation6 + $0x80] sm:$0xf]
    %v1253 = vld [vmem:[#allocation6 + $0x84] sm:$0xf]
    %v1254 = vld [vmem:[#allocation6 + $0x88] sm:$0xf]
    %v1255 = vld [vmem:[#allocation6 + $0x8c] sm:$0xf]
    %v1256 = vld [vmem:[#allocation6 + $0x90] sm:$0xf]
    %v1257 = vld [vmem:[#allocation6 + $0x94] sm:$0xf]
    %v1258 = vld [vmem:[#allocation6 + $0x98] sm:$0xf]
    %v1259 = vld [vmem:[#allocation6 + $0x9c] sm:$0xf]
    %v1260 = vld [vmem:[#allocation6 + $0xa0] sm:$0xf]
    %v1261 = vld [vmem:[#allocation6 + $0xa4] sm:$0xf]
    %v1262 = vld [vmem:[#allocation6 + $0xa8] sm:$0xf]
    %v1263 = vld [vmem:[#allocation6 + $0xac] sm:$0xf]
    %v1264 = vld [vmem:[#allocation6 + $0xb0] sm:$0xf]
    %v1265 = vld [vmem:[#allocation6 + $0xb4] sm:$0xf]
    %v1266 = vld [vmem:[#allocation6 + $0xb8] sm:$0xf]
    %v1267 = vld [vmem:[#allocation6 + $0xbc] sm:$0xf]
    %v1268 = vld [vmem:[%s5] sm:$0x1]
    %v1270 = vperm.slane %v1268, 0
    %v1320 = vunpack.c.l.b16 %v1220
    %v1321 = vunpack.c.l.b16 %v1221
    %v1322 = vunpack.c.l.b16 %v1222
    %v1323 = vunpack.c.l.b16 %v1223
    %v1324 = vunpack.c.l.b16 %v1224
    %v1325 = vunpack.c.l.b16 %v1225
    %v1326 = vunpack.c.l.b16 %v1226
    %v1327 = vunpack.c.l.b16 %v1227
    %v1328 = vunpack.c.l.b16 %v1228
    %v1329 = vunpack.c.l.b16 %v1229
    %v1330 = vunpack.c.l.b16 %v1230
    %v1331 = vunpack.c.l.b16 %v1231
    %v1332 = vunpack.c.l.b16 %v1232
    %v1333 = vunpack.c.l.b16 %v1233
    %v1334 = vunpack.c.l.b16 %v1234
    %v1335 = vunpack.c.l.b16 %v1235
    %v1336 = vunpack.c.l.b16 %v1236
    %v1337 = vunpack.c.l.b16 %v1237
    %v1338 = vunpack.c.l.b16 %v1238
    %v1339 = vunpack.c.l.b16 %v1239
    %v1340 = vunpack.c.l.b16 %v1240
    %v1341 = vunpack.c.l.b16 %v1241
    %v1342 = vunpack.c.l.b16 %v1242
    %v1343 = vunpack.c.l.b16 %v1243
    %v1344 = vunpack.c.l.b16 %v1244
    %v1345 = vunpack.c.l.b16 %v1245
    %v1346 = vunpack.c.l.b16 %v1246
    %v1347 = vunpack.c.l.b16 %v1247
    %v1348 = vunpack.c.l.b16 %v1248
    %v1349 = vunpack.c.l.b16 %v1249
    %v1350 = vunpack.c.l.b16 %v1250
    %v1351 = vunpack.c.l.b16 %v1251
    %v1352 = vunpack.c.l.b16 %v1252
    %v1353 = vunpack.c.l.b16 %v1253
    %v1354 = vunpack.c.l.b16 %v1254
    %v1355 = vunpack.c.l.b16 %v1255
    %v1356 = vunpack.c.l.b16 %v1256
    %v1357 = vunpack.c.l.b16 %v1257
    %v1358 = vunpack.c.l.b16 %v1258
    %v1359 = vunpack.c.l.b16 %v1259
    %v1360 = vunpack.c.l.b16 %v1260
    %v1361 = vunpack.c.l.b16 %v1261
    %v1362 = vunpack.c.l.b16 %v1262
    %v1363 = vunpack.c.l.b16 %v1263
    %v1364 = vunpack.c.l.b16 %v1264
    %v1365 = vunpack.c.l.b16 %v1265
    %v1366 = vunpack.c.l.b16 %v1266
    %v1367 = vunpack.c.l.b16 %v1267
    %v1368 = vpack.c.b16 %v1321, %v1320
    %v1369 = vpack.c.b16 %v1323, %v1322
    %v1370 = vpack.c.b16 %v1325, %v1324
    %v1371 = vpack.c.b16 %v1327, %v1326
    %v1372 = vpack.c.b16 %v1329, %v1328
    %v1373 = vpack.c.b16 %v1331, %v1330
    %v1374 = vpack.c.b16 %v1333, %v1332
    %v1375 = vpack.c.b16 %v1335, %v1334
    %v1376 = vpack.c.b16 %v1337, %v1336
    %v1377 = vpack.c.b16 %v1339, %v1338
    %v1378 = vpack.c.b16 %v1341, %v1340
    %v1379 = vpack.c.b16 %v1343, %v1342
    %v1380 = vpack.c.b16 %v1345, %v1344
    %v1381 = vpack.c.b16 %v1347, %v1346
    %v1382 = vpack.c.b16 %v1349, %v1348
    %v1383 = vpack.c.b16 %v1351, %v1350
    %v1384 = vpack.c.b16 %v1353, %v1352
    %v1385 = vpack.c.b16 %v1355, %v1354
    %v1386 = vpack.c.b16 %v1357, %v1356
    %v1387 = vpack.c.b16 %v1359, %v1358
    %v1388 = vpack.c.b16 %v1361, %v1360
    %v1389 = vpack.c.b16 %v1363, %v1362
    %v1390 = vpack.c.b16 %v1365, %v1364
    %v1391 = vpack.c.b16 %v1367, %v1366
    %1416 = vmatpush.bf16.msra.mxu0 %v1375
    %1417 = vmatpush.bf16.msra.mxu0 %v1374
    %1418 = vmatpush.bf16.msra.mxu0 %v1373
    %1419 = vmatpush.bf16.msra.mxu0 %v1372
    %1420 = vmatpush.bf16.msra.mxu0 %v1371
    %1421 = vmatpush.bf16.msra.mxu0 %v1370
    %1422 = vmatpush.bf16.msra.mxu0 %v1369
    %1423 = vmatpush.bf16.msra.mxu0 %v1368
    %1424 = vmatmul.bf16.gmra.mxu0 %v1108
    %v1425 = vpop.f32.mrf.mxu0
    %v1426 = vadd.f32 %v1270, %v1425
    %v1427 = vpop.f32.mrf.mxu0
    %v1428 = vadd.f32 %v1270, %v1427
    %1429 = vmatmul.bf16.gmra.mxu0 %v1109
    %v1430 = vpop.f32.mrf.mxu0
    %v1431 = vadd.f32 %v1270, %v1430
    %v1432 = vpop.f32.mrf.mxu0
    %v1433 = vadd.f32 %v1270, %v1432
    %1434 = vmatmul.bf16.gmra.mxu0 %v1110
    %v1435 = vpop.f32.mrf.mxu0
    %v1436 = vadd.f32 %v1270, %v1435
    %v1437 = vpop.f32.mrf.mxu0
    %v1438 = vadd.f32 %v1270, %v1437
    %1439 = vmatmul.bf16.gmra.mxu0 %v1111
    %v1440 = vpop.f32.mrf.mxu0
    %v1441 = vadd.f32 %v1270, %v1440
    %v1442 = vpop.f32.mrf.mxu0
    %v1443 = vadd.f32 %v1270, %v1442
    %1444 = vmatmul.bf16.gmra.mxu0 %v1112
    %v1445 = vpop.f32.mrf.mxu0
    %v1446 = vadd.f32 %v1270, %v1445
    %v1447 = vpop.f32.mrf.mxu0
    %v1448 = vadd.f32 %v1270, %v1447
    %1449 = vmatmul.bf16.gmra.mxu0 %v1113
    %v1450 = vpop.f32.mrf.mxu0
    %v1451 = vadd.f32 %v1270, %v1450
    %v1452 = vpop.f32.mrf.mxu0
    %v1453 = vadd.f32 %v1270, %v1452
    %1454 = vmatmul.bf16.gmra.mxu0 %v1114
    %v1455 = vpop.f32.mrf.mxu0
    %v1456 = vadd.f32 %v1270, %v1455
    %v1457 = vpop.f32.mrf.mxu0
    %v1458 = vadd.f32 %v1270, %v1457
    %1459 = vmatmul.bf16.gmra.mxu0 %v1115
    %v1460 = vpop.f32.mrf.mxu0
    %v1461 = vadd.f32 %v1270, %v1460
    %v1462 = vpop.f32.mrf.mxu0
    %v1463 = vadd.f32 %v1270, %v1462
    %1464 = vdwg.mxu0
    %1465 = vmatpush.bf16.msra.mxu0 %v1383
    %1466 = vmatpush.bf16.msra.mxu0 %v1382
    %1467 = vmatpush.bf16.msra.mxu0 %v1381
    %1468 = vmatpush.bf16.msra.mxu0 %v1380
    %1469 = vmatpush.bf16.msra.mxu0 %v1379
    %1470 = vmatpush.bf16.msra.mxu0 %v1378
    %1471 = vmatpush.bf16.msra.mxu0 %v1377
    %1472 = vmatpush.bf16.msra.mxu0 %v1376
    %1473 = vmatmul.bf16.gmra.mxu0 %v1156
    %v1474 = vpop.f32.mrf.mxu0
    %v1475 = vadd.f32 %v1426, %v1474
    %v1476 = vpop.f32.mrf.mxu0
    %v1477 = vadd.f32 %v1428, %v1476
    %1478 = vmatmul.bf16.gmra.mxu0 %v1157
    %v1479 = vpop.f32.mrf.mxu0
    %v1480 = vadd.f32 %v1431, %v1479
    %v1481 = vpop.f32.mrf.mxu0
    %v1482 = vadd.f32 %v1433, %v1481
    %1483 = vmatmul.bf16.gmra.mxu0 %v1158
    %v1484 = vpop.f32.mrf.mxu0
    %v1485 = vadd.f32 %v1436, %v1484
    %v1486 = vpop.f32.mrf.mxu0
    %v1487 = vadd.f32 %v1438, %v1486
    %1488 = vmatmul.bf16.gmra.mxu0 %v1159
    %v1489 = vpop.f32.mrf.mxu0
    %v1490 = vadd.f32 %v1441, %v1489
    %v1491 = vpop.f32.mrf.mxu0
    %v1492 = vadd.f32 %v1443, %v1491
    %1493 = vmatmul.bf16.gmra.mxu0 %v1160
    %v1494 = vpop.f32.mrf.mxu0
    %v1495 = vadd.f32 %v1446, %v1494
    %v1496 = vpop.f32.mrf.mxu0
    %v1497 = vadd.f32 %v1448, %v1496
    %1498 = vmatmul.bf16.gmra.mxu0 %v1161
    %v1499 = vpop.f32.mrf.mxu0
    %v1500 = vadd.f32 %v1451, %v1499
    %v1501 = vpop.f32.mrf.mxu0
    %v1502 = vadd.f32 %v1453, %v1501
    %1503 = vmatmul.bf16.gmra.mxu0 %v1162
    %v1504 = vpop.f32.mrf.mxu0
    %v1505 = vadd.f32 %v1456, %v1504
    %v1506 = vpop.f32.mrf.mxu0
    %v1507 = vadd.f32 %v1458, %v1506
    %1508 = vmatmul.bf16.gmra.mxu0 %v1163
    %v1509 = vpop.f32.mrf.mxu0
    %v1510 = vadd.f32 %v1461, %v1509
    %v1511 = vpop.f32.mrf.mxu0
    %v1512 = vadd.f32 %v1463, %v1511
    %1513 = vdwg.mxu0
    %1514 = vmatpush.bf16.msra.mxu0 %v1391
    %1515 = vmatpush.bf16.msra.mxu0 %v1390
    %1516 = vmatpush.bf16.msra.mxu0 %v1389
    %1517 = vmatpush.bf16.msra.mxu0 %v1388
    %1518 = vmatpush.bf16.msra.mxu0 %v1387
    %1519 = vmatpush.bf16.msra.mxu0 %v1386
    %1520 = vmatpush.bf16.msra.mxu0 %v1385
    %1521 = vmatpush.bf16.msra.mxu0 %v1384
    %1522 = vmatmul.bf16.gmra.mxu0 %v1204
    %v1523 = vpop.f32.mrf.mxu0
    %v1524 = vadd.f32 %v1475, %v1523
    %v1525 = vpop.f32.mrf.mxu0
    %v1526 = vadd.f32 %v1477, %v1525
    %1527 = vmatmul.bf16.gmra.mxu0 %v1205
    %v1528 = vpop.f32.mrf.mxu0
    %v1529 = vadd.f32 %v1480, %v1528
    %v1530 = vpop.f32.mrf.mxu0
    %v1531 = vadd.f32 %v1482, %v1530
    %1532 = vmatmul.bf16.gmra.mxu0 %v1206
    %v1533 = vpop.f32.mrf.mxu0
    %v1534 = vadd.f32 %v1485, %v1533
    %v1535 = vpop.f32.mrf.mxu0
    %v1536 = vadd.f32 %v1487, %v1535
    %1537 = vmatmul.bf16.gmra.mxu0 %v1207
    %v1538 = vpop.f32.mrf.mxu0
    %v1539 = vadd.f32 %v1490, %v1538
    %v1540 = vpop.f32.mrf.mxu0
    %v1541 = vadd.f32 %v1492, %v1540
    %1542 = vmatmul.bf16.gmra.mxu0 %v1208
    %v1543 = vpop.f32.mrf.mxu0
    %v1544 = vadd.f32 %v1495, %v1543
    %v1545 = vpop.f32.mrf.mxu0
    %v1546 = vadd.f32 %v1497, %v1545
    %1547 = vmatmul.bf16.gmra.mxu0 %v1209
    %v1548 = vpop.f32.mrf.mxu0
    %v1549 = vadd.f32 %v1500, %v1548
    %v1550 = vpop.f32.mrf.mxu0
    %v1551 = vadd.f32 %v1502, %v1550
    %1552 = vmatmul.bf16.gmra.mxu0 %v1210
    %v1553 = vpop.f32.mrf.mxu0
    %v1554 = vadd.f32 %v1505, %v1553
    %v1555 = vpop.f32.mrf.mxu0
    %v1556 = vadd.f32 %v1507, %v1555
    %1557 = vmatmul.bf16.gmra.mxu0 %v1211
    %v1558 = vpop.f32.mrf.mxu0
    %v1559 = vadd.f32 %v1510, %v1558
    %v1560 = vpop.f32.mrf.mxu0
    %v1561 = vadd.f32 %v1512, %v1560
    %1562 = vdwg.mxu0
    %v1563 = vmax.f32 %v1524, 0.0
    %v1564 = vmax.f32 %v1526, 0.0
    %v1565 = vmax.f32 %v1529, 0.0
    %v1566 = vmax.f32 %v1531, 0.0
    %v1567 = vmax.f32 %v1534, 0.0
    %v1568 = vmax.f32 %v1536, 0.0
    %v1569 = vmax.f32 %v1539, 0.0
    %v1570 = vmax.f32 %v1541, 0.0
    %v1571 = vmax.f32 %v1544, 0.0
    %v1572 = vmax.f32 %v1546, 0.0
    %v1573 = vmax.f32 %v1549, 0.0
    %v1574 = vmax.f32 %v1551, 0.0
    %v1575 = vmax.f32 %v1554, 0.0
    %v1576 = vmax.f32 %v1556, 0.0
    %v1577 = vmax.f32 %v1559, 0.0
    %v1578 = vmax.f32 %v1561, 0.0
    %v1579 = vmax.f32 %v1563, %v1564
    %v1580 = vrot.slane %v1579, 4
    %v1581 = vmax.f32 %v1579, %v1580
    %v1582 = vrot.slane %v1581, 2
    %v1583 = vmax.f32 %v1581, %v1582
    %v1584 = vrot.slane %v1583, 1
    %v1585 = vmax.f32 %v1583, %v1584
    %v1586 = vmax.f32 %v1565, %v1566
    %v1587 = vrot.slane %v1586, 4
    %v1588 = vmax.f32 %v1586, %v1587
    %v1589 = vrot.slane %v1588, 2
    %v1590 = vmax.f32 %v1588, %v1589
    %v1591 = vrot.slane %v1590, 1
    %v1592 = vmax.f32 %v1590, %v1591
    %v1593 = vmax.f32 %v1567, %v1568
    %v1594 = vrot.slane %v1593, 4
    %v1595 = vmax.f32 %v1593, %v1594
    %v1596 = vrot.slane %v1595, 2
    %v1597 = vmax.f32 %v1595, %v1596
    %v1598 = vrot.slane %v1597, 1
    %v1599 = vmax.f32 %v1597, %v1598
    %v1600 = vmax.f32 %v1569, %v1570
    %v1601 = vrot.slane %v1600, 4
    %v1602 = vmax.f32 %v1600, %v1601
    %v1603 = vrot.slane %v1602, 2
    %v1604 = vmax.f32 %v1602, %v1603
    %v1605 = vrot.slane %v1604, 1
    %v1606 = vmax.f32 %v1604, %v1605
    %v1607 = vmax.f32 %v1571, %v1572
    %v1608 = vrot.slane %v1607, 4
    %v1609 = vmax.f32 %v1607, %v1608
    %v1610 = vrot.slane %v1609, 2
    %v1611 = vmax.f32 %v1609, %v1610
    %v1612 = vrot.slane %v1611, 1
    %v1613 = vmax.f32 %v1611, %v1612
    %v1614 = vmax.f32 %v1573, %v1574
    %v1615 = vrot.slane %v1614, 4
    %v1616 = vmax.f32 %v1614, %v1615
    %v1617 = vrot.slane %v1616, 2
    %v1618 = vmax.f32 %v1616, %v1617
    %v1619 = vrot.slane %v1618, 1
    %v1620 = vmax.f32 %v1618, %v1619
    %v1621 = vmax.f32 %v1575, %v1576
    %v1622 = vrot.slane %v1621, 4
    %v1623 = vmax.f32 %v1621, %v1622
    %v1624 = vrot.slane %v1623, 2
    %v1625 = vmax.f32 %v1623, %v1624
    %v1626 = vrot.slane %v1625, 1
    %v1627 = vmax.f32 %v1625, %v1626
    %v1628 = vmax.f32 %v1577, %v1578
    %v1629 = vrot.slane %v1628, 4
    %v1630 = vmax.f32 %v1628, %v1629
    %v1631 = vrot.slane %v1630, 2
    %v1632 = vmax.f32 %v1630, %v1631
    %v1633 = vrot.slane %v1632, 1
    %v1634 = vmax.f32 %v1632, %v1633
    %vm1643 = vcmask 1041409
    %v1644 = vsel %vm1643, %v1592, %v1585
    %vm1645 = vcmask 1042434
    %v1646 = vsel %vm1645, %v1599, %v1644
    %vm1647 = vcmask 1043459
    %v1648 = vsel %vm1647, %v1606, %v1646
    %vm1649 = vcmask 1044484
    %v1650 = vsel %vm1649, %v1613, %v1648
    %vm1651 = vcmask 1045509
    %v1652 = vsel %vm1651, %v1620, %v1650
    %vm1653 = vcmask 1046534
    %v1654 = vsel %vm1653, %v1627, %v1652
    %vm1655 = vcmask 1047559
    %v1656 = vsel %vm1655, %v1634, %v1654
    %1658 = vst [vmem:[#allocation8] sm:$0xff] %v1656
    // Predicated region
    $region34: #{tpu_custom_call.1} parent=1 // pred_check
      _
    $region35: #{tpu_custom_call.1} parent=1 // pred_check_branch
      %1660 = sbr.rel (0) target = $region37
    $region36: #{tpu_custom_call.1} parent=1 // pred_region
      %1662 = vsyncadd [#allocation5], 0
      %s1664 = sshll.u32 [#allocation8], 4
      %s1665 = int_to_ptr.vmem [resolvable:$true] %s1664
      %s1666 = sshll.u32 %s6, 4
      %s1667 = int_to_ptr.hbm [resolvable:$true] %s1666
      %1669 = dma.vmem_to_hbm [thread:$0]  %s1665, 128, %s1667, [#allocation5]
    $region37: #{tpu_custom_call.1} parent=1 // pred_fallthru
      _
    // Predicated region
    $region38: #{tpu_custom_call.1} parent=1 // pred_check
      _
    $region39: #{tpu_custom_call.1} parent=1 // pred_check_branch
      %1671 = sbr.rel (0) target = $region41
    $region40: #{tpu_custom_call.1} parent=1 // pred_region
      %1673 = dma.done [#allocation5], 128
    $region41: #{tpu_custom_call.1} parent=1 // pred_fallthru
      _
    %1674 = vsyncpa [#allocation4], 1
    %1675 = vsyncpa [#allocation7], 1
    %1676 = vsyncpa [#allocation5], 1

</llo_original>
